<compile_context>
chip_gen: v5e
topology: v5e:2x2
jax: 0.10.0
libtpu: 0.0.40
codegen_flags: <defaults>
</compile_context>

<pallas_src>
import functools

import jax
import jax.numpy as jnp
from jax.experimental import pallas as pl
from jax.experimental.pallas import tpu as pltpu


def _round_up(v, m):
    return -(-v // m) * m


def _mlp_kernel(x_ref, w1_ref, w2_ref, w3_ref, w4_ref, packed_ref, out_ref,
                *, h1, h2, h3, h4):
    """One batch tile of the fused MLP.

    x_ref is [TB, F] (batch-major, straight from HBM).  All intermediate
    activations are kept transposed [features, TB] so batch rides the lane
    axis and the final (64 -> 1) layer is a VPU multiply + sublane reduction
    producing a lane-dense [1, TB] row.
    """
    # Packed per-feature constants (f32): columns are
    #   0: b1   1: b2'   2: b3'   3: b4'   4: w5' (folded)   5: b5'
    b1 = packed_ref[0:h1, 0:1]
    b2 = packed_ref[0:h2, 1:2]
    b3 = packed_ref[0:h3, 2:3]
    b4 = packed_ref[0:h4, 3:4]
    w5 = packed_ref[0:h4, 4:5]
    b5 = packed_ref[0:1, 5:6]

    # Layer 1: contract on F (last dim of both operands) so the result lands
    # as [h1, TB] with batch on the lane axis -- no wrapper-side transpose.
    x_bf = x_ref[...].astype(jnp.bfloat16)
    pre = jax.lax.dot_general(
        w1_ref[...], x_bf,
        dimension_numbers=(((1,), (1,)), ((), ())),
        preferred_element_type=jnp.float32) + b1
    a = jnp.maximum(pre, 0.0)                                 # [h1, TB]

    def layer(w_ref, h, bias):
        # bf16 matmul on the MXU with f32 accumulation; bias/ReLU in f32
        # (v5e has no bf16 VPU; the MXU stream dominates on v6e/v7x anyway).
        p = jnp.dot(w_ref[...], h.astype(jnp.bfloat16),
                    preferred_element_type=jnp.float32) + bias
        return jnp.maximum(p, 0.0)

    a = layer(w2_ref, a, b2)                                  # [h2, TB]
    a = layer(w3_ref, a, b3)                                  # [h3, TB]
    a = layer(w4_ref, a, b4)                                  # [h4, TB]

    # layer_out: Linear(64, 1) as VPU multiply + sublane reduction -> [1, TB]
    out = jnp.sum(a * w5, axis=0, keepdims=True) + b5
    out_ref[...] = out.astype(out_ref.dtype)


def binary_classification_forward(x, params, *, batch_tile=1024):
    """Fused eval-mode forward pass.  x: [B, input_shape] float32 -> [B, 1]."""
    B, F = x.shape

    (w1, b1, g1, be1, m1, v1,
     w2, b2, g2, be2, m2, v2,
     w3, b3, g3, be3, m3, v3,
     w4, b4, g4, be4, m4, v4,
     w5, b5) = params                        # weights in PyTorch layout [out, in]

    eps = 1e-5  # nn.BatchNorm1d default

    def fold(gamma, beta, mean, var):
        s = gamma / jnp.sqrt(var + eps)
        return s, beta - mean * s

    # Fold each BatchNorm (which follows ReLU) into the NEXT linear layer:
    #   (h*s + t) @ Wk.T + bk  ==  h @ (Wk * s).T + (bk + Wk @ t)
    s1, t1 = fold(g1, be1, m1, v1)
    s2, t2 = fold(g2, be2, m2, v2)
    s3, t3 = fold(g3, be3, m3, v3)
    s4, t4 = fold(g4, be4, m4, v4)

    w2f, b2f = w2 * s1[None, :], b2 + w2 @ t1
    w3f, b3f = w3 * s2[None, :], b3 + w3 @ t2
    w4f, b4f = w4 * s3[None, :], b4 + w4 @ t3
    w5f, b5f = w5 * s4[None, :], b5 + w5 @ t4        # [1, 64], [1]

    h1, h2, h3, h4 = w1.shape[0], w2.shape[0], w3.shape[0], w4.shape[0]
    hmax = max(h1, h2, h3, h4)

    def col(v):
        c = jnp.zeros((hmax,), jnp.float32)
        return c.at[: v.shape[0]].set(v.astype(jnp.float32))

    packed = jnp.stack(
        [col(b1), col(b2f), col(b3f), col(b4f), col(w5f[0]), col(b5f)], axis=1
    )                                                   # [hmax, 6] f32

    # --- batch tiling ---------------------------------------------------------
    # lane dim (batch) is a multiple of 128; large tiles amortize the ~0.35 us
    # per-step overhead and per-layer MXU weight pushes.
    tile = _round_up(max(batch_tile, 128), 128)
    # v7x: keep >= 2 grid steps whenever the batch is big enough so the
    # "parallel" grid axis shards across both TensorCores.
    if B >= 256:
        tile = min(tile, _round_up(-(-B // 2), 128))
    tile = min(tile, _round_up(B, 128))
    B_pad = _round_up(B, tile)
    grid = (B_pad // tile,)

    # x stays batch-major: one fused cast(+pad) pass at most, no transpose.
    x_b = x.astype(jnp.bfloat16)
    if B_pad != B:
        x_b = jnp.pad(x_b, ((0, B_pad - B), (0, 0)))

    w1b = w1.astype(jnp.bfloat16)
    w2b = w2f.astype(jnp.bfloat16)
    w3b = w3f.astype(jnp.bfloat16)
    w4b = w4f.astype(jnp.bfloat16)

    # Advisory cost estimate so XLA schedules the custom call vs. the
    # surrounding cast/pad/slice ops sensibly.
    flops = 2 * B_pad * (F * h1 + h1 * h2 + h2 * h3 + h3 * h4 + h4)
    bytes_accessed = int(B_pad * F * 2
                         + (h1 * F + h2 * h1 + h3 * h2 + h4 * h3) * 2
                         + hmax * 6 * 4
                         + B_pad * 4)
    cost = pl.CostEstimate(flops=int(flops), transcendentals=0,
                           bytes_accessed=bytes_accessed)

    # Only set an explicit VMEM limit if the footprint could approach the
    # scoped-VMEM default (large F / very large tile); keep headroom under
    # v7x's 64 MiB physical VMEM.
    vmem_est = (2 * tile * F * 2                                   # x tile (2 bufs, bf16)
                + 2 * (h1 * F + h2 * h1 + h3 * h2 + h4 * h3) * 2   # weights (bf16)
                + 2 * hmax * 6 * 4                                 # packed constants
                + 2 * tile * 4                                     # output row (f32)
                + 4 * tile * (h1 + h2 + h3 + h4))                  # f32 intermediates
    vmem_limit = None
    if vmem_est > (12 << 20):
        vmem_limit = min(int(vmem_est) + (8 << 20), 48 << 20)

    kernel = functools.partial(_mlp_kernel, h1=h1, h2=h2, h3=h3, h4=h4)
    operands = (x_b, w1b, w2b, w3b, w4b, packed)

    def call(single_buffer_weights):
        def rep(arr):
            # Replicated blocks (same tile every grid step): single buffer is
            # enough -- double buffering them only wastes VMEM + priming DMAs.
            if single_buffer_weights:
                return pl.BlockSpec(arr.shape, lambda i: (0, 0),
                                    pipeline_mode=pl.Buffered(1))
            return pl.BlockSpec(arr.shape, lambda i: (0, 0))

        return pl.pallas_call(
            kernel,
            out_shape=jax.ShapeDtypeStruct((1, B_pad), jnp.float32),
            grid=grid,
            in_specs=[pl.BlockSpec((tile, F), lambda i: (i, 0))]
                     + [rep(a) for a in operands[1:]],
            out_specs=pl.BlockSpec((1, tile), lambda i: (0, i)),   # lane-dense
            compiler_params=pltpu.CompilerParams(
                dimension_semantics=("parallel",),
                vmem_limit_bytes=vmem_limit),
            cost_estimate=cost,
        )(*operands)

    try:
        out = call(single_buffer_weights=True)
    except Exception:
        # pipeline_mode=pl.Buffered(1) unsupported on this JAX build ->
        # fall back to default (double-buffered) replicated operands.
        out = call(single_buffer_weights=False)

    return out[0, :B][:, None]                            # [B, 1]


def init_params(key, input_shape):
    """Deterministic parameter init mirroring the module's layer shapes."""
    dims = [(input_shape, 128), (128, 128), (128, 64), (64, 64), (64, 1)]
    params = []
    for idx, (fan_in, fan_out) in enumerate(dims):
        key, kw, kb = jax.random.split(key, 3)
        bound = 1.0 / jnp.sqrt(jnp.float32(fan_in))
        # PyTorch nn.Linear layout: weight is [out_features, in_features]
        w = jax.random.uniform(kw, (fan_out, fan_in), jnp.float32, -bound, bound)
        b = jax.random.uniform(kb, (fan_out,), jnp.float32, -bound, bound)
        params.extend([w, b])
        if idx < 4:  # batchnorm after the first four linears
            key, kg, kbe = jax.random.split(key, 3)
            gamma = 1.0 + 0.1 * jax.random.normal(kg, (fan_out,), jnp.float32)
            beta = 0.1 * jax.random.normal(kbe, (fan_out,), jnp.float32)
            mean = jnp.zeros((fan_out,), jnp.float32)   # running_mean init
            var = jnp.ones((fan_out,), jnp.float32)     # running_var init
            params.extend([gamma, beta, mean, var])
    return tuple(params)


def reference_forward(x, params):
    """Pure-JAX f32 reference of the module's eval-mode forward pass."""
    (w1, b1, g1, be1, m1, v1,
     w2, b2, g2, be2, m2, v2,
     w3, b3, g3, be3, m3, v3,
     w4, b4, g4, be4, m4, v4,
     w5, b5) = params
    eps = 1e-5

    def block(h, w, b, g, be, m, v):
        h = jnp.maximum(h @ w.T + b, 0.0)
        return (h - m) / jnp.sqrt(v + eps) * g + be

    h = block(x, w1, b1, g1, be1, m1, v1)
    h = block(h, w2, b2, g2, be2, m2, v2)
    h = block(h, w3, b3, g3, be3, m3, v3)
    h = block(h, w4, b4, g4, be4, m4, v4)
    return h @ w5.T + b5


if __name__ == "__main__":
    key = jax.random.PRNGKey(0)
    input_shape = 32

    kx, kp, kx2 = jax.random.split(key, 3)
    params = init_params(kp, input_shape)

    # Small primary check (B=16): single-tile path.
    B = 16
    x = jax.random.normal(kx, (B, input_shape), jnp.float32)
    out = jax.block_until_ready(binary_classification_forward(x, params))
    ref = reference_forward(x, params)
    assert out.shape == (B, 1)
    max_err = float(jnp.max(jnp.abs(out - ref)))
    assert max_err < 5e-2, f"mismatch vs reference (B=16): max abs err {max_err}"

    # Secondary check (B=300): exercises padding + the >=2-step grid path.
    B2 = 300
    x2 = jax.random.normal(kx2, (B2, input_shape), jnp.float32)
    out2 = jax.block_until_ready(binary_classification_forward(x2, params))
    ref2 = reference_forward(x2, params)
    assert out2.shape == (B2, 1)
    max_err2 = float(jnp.max(jnp.abs(out2 - ref2)))
    assert max_err2 < 5e-2, f"mismatch vs reference (B=300): max abs err {max_err2}"

    print("KERNEL_OK")
</pallas_src>

<mosaic_0001>
module attributes {stable_mosaic.version = 11 : i64} {
  func.func @_mlp_kernel(%arg0: i32, %arg1: memref<128x32xbf16, #tpu.memory_space<vmem>>, %arg2: memref<128x32xbf16, #tpu.memory_space<vmem>>, %arg3: memref<128x128xbf16, #tpu.memory_space<vmem>>, %arg4: memref<64x128xbf16, #tpu.memory_space<vmem>>, %arg5: memref<64x64xbf16, #tpu.memory_space<vmem>>, %arg6: memref<128x6xf32, #tpu.memory_space<vmem>>, %arg7: memref<1x128xf32, #tpu.memory_space<vmem>>) attributes {dimension_semantics = [#tpu.dimension_semantics<parallel>], iteration_bounds = array<i64: 1>, scalar_prefetch = 0 : i64, scratch_operands = 0 : i64, tpu.core_type = #tpu.core_type<tc>, window_params = [{transform_indices = @transform_0, window_bounds = array<i64: 128, 32>}, {pipeline_mode = #tpu.pipeline_mode<synchronous>, transform_indices = @transform_1, window_bounds = array<i64: 128, 32>}, {pipeline_mode = #tpu.pipeline_mode<synchronous>, transform_indices = @transform_2, window_bounds = array<i64: 128, 128>}, {pipeline_mode = #tpu.pipeline_mode<synchronous>, transform_indices = @transform_3, window_bounds = array<i64: 64, 128>}, {pipeline_mode = #tpu.pipeline_mode<synchronous>, transform_indices = @transform_4, window_bounds = array<i64: 64, 64>}, {pipeline_mode = #tpu.pipeline_mode<synchronous>, transform_indices = @transform_5, window_bounds = array<i64: 128, 6>}, {transform_indices = @transform_6, window_bounds = array<i64: 1, 128>}]} {
    %c0 = arith.constant 0 : index
    %c0_0 = arith.constant 0 : index
    %0 = vector.load %arg6[%c0, %c0_0] : memref<128x6xf32, #tpu.memory_space<vmem>>, vector<128x1xf32>
    %c0_1 = arith.constant 0 : index
    %c1 = arith.constant 1 : index
    %1 = vector.load %arg6[%c0_1, %c1] : memref<128x6xf32, #tpu.memory_space<vmem>>, vector<128x1xf32>
    %c0_2 = arith.constant 0 : index
    %c2 = arith.constant 2 : index
    %2 = vector.load %arg6[%c0_2, %c2] : memref<128x6xf32, #tpu.memory_space<vmem>>, vector<64x1xf32>
    %c0_3 = arith.constant 0 : index
    %c3 = arith.constant 3 : index
    %3 = vector.load %arg6[%c0_3, %c3] : memref<128x6xf32, #tpu.memory_space<vmem>>, vector<64x1xf32>
    %c0_4 = arith.constant 0 : index
    %c4 = arith.constant 4 : index
    %4 = vector.load %arg6[%c0_4, %c4] : memref<128x6xf32, #tpu.memory_space<vmem>>, vector<64x1xf32>
    %c0_5 = arith.constant 0 : index
    %c5 = arith.constant 5 : index
    %5 = vector.load %arg6[%c0_5, %c5] : memref<128x6xf32, #tpu.memory_space<vmem>>, vector<1x1xf32>
    %c0_6 = arith.constant 0 : index
    %c0_7 = arith.constant 0 : index
    %6 = vector.load %arg1[%c0_6, %c0_7] : memref<128x32xbf16, #tpu.memory_space<vmem>>, vector<128x32xbf16>
    %c0_8 = arith.constant 0 : index
    %c0_9 = arith.constant 0 : index
    %7 = vector.load %arg2[%c0_8, %c0_9] : memref<128x32xbf16, #tpu.memory_space<vmem>>, vector<128x32xbf16>
    %cst = arith.constant dense<0.000000e+00> : vector<128x128xf32>
    %8 = tpu.matmul %7, %6, %cst {dimension_numbers = #tpu.dot_dimension_numbers<[1], [1], [0], [0], [0, 0, 1, 0], [], []>} : vector<128x32xbf16>, vector<128x32xbf16>, vector<128x128xf32> -> vector<128x128xf32>
    %9 = vector.broadcast %0 : vector<128x1xf32> to vector<128x128xf32>
    %10 = arith.addf %8, %9 : vector<128x128xf32>
    %cst_10 = arith.constant 0.000000e+00 : f32
    %11 = vector.broadcast %cst_10 : f32 to vector<128x128xf32>
    %12 = arith.maximumf %10, %11 : vector<128x128xf32>
    %c0_11 = arith.constant 0 : index
    %c0_12 = arith.constant 0 : index
    %13 = vector.load %arg3[%c0_11, %c0_12] : memref<128x128xbf16, #tpu.memory_space<vmem>>, vector<128x128xbf16>
    %14 = arith.truncf %12 : vector<128x128xf32> to vector<128x128xbf16>
    %cst_13 = arith.constant dense<0.000000e+00> : vector<128x128xf32>
    %15 = tpu.matmul %13, %14, %cst_13 {dimension_numbers = #tpu.dot_dimension_numbers<[1], [0], [0], [1], [0, 0, 1, 1], [], []>} : vector<128x128xbf16>, vector<128x128xbf16>, vector<128x128xf32> -> vector<128x128xf32>
    %16 = vector.broadcast %1 : vector<128x1xf32> to vector<128x128xf32>
    %17 = arith.addf %15, %16 : vector<128x128xf32>
    %cst_14 = arith.constant 0.000000e+00 : f32
    %18 = vector.broadcast %cst_14 : f32 to vector<128x128xf32>
    %19 = arith.maximumf %17, %18 : vector<128x128xf32>
    %c0_15 = arith.constant 0 : index
    %c0_16 = arith.constant 0 : index
    %20 = vector.load %arg4[%c0_15, %c0_16] : memref<64x128xbf16, #tpu.memory_space<vmem>>, vector<64x128xbf16>
    %21 = arith.truncf %19 : vector<128x128xf32> to vector<128x128xbf16>
    %cst_17 = arith.constant dense<0.000000e+00> : vector<64x128xf32>
    %22 = tpu.matmul %20, %21, %cst_17 {dimension_numbers = #tpu.dot_dimension_numbers<[1], [0], [0], [1], [0, 0, 1, 1], [], []>} : vector<64x128xbf16>, vector<128x128xbf16>, vector<64x128xf32> -> vector<64x128xf32>
    %23 = vector.broadcast %2 : vector<64x1xf32> to vector<64x128xf32>
    %24 = arith.addf %22, %23 : vector<64x128xf32>
    %cst_18 = arith.constant 0.000000e+00 : f32
    %25 = vector.broadcast %cst_18 : f32 to vector<64x128xf32>
    %26 = arith.maximumf %24, %25 : vector<64x128xf32>
    %c0_19 = arith.constant 0 : index
    %c0_20 = arith.constant 0 : index
    %27 = vector.load %arg5[%c0_19, %c0_20] : memref<64x64xbf16, #tpu.memory_space<vmem>>, vector<64x64xbf16>
    %28 = arith.truncf %26 : vector<64x128xf32> to vector<64x128xbf16>
    %cst_21 = arith.constant dense<0.000000e+00> : vector<64x128xf32>
    %29 = tpu.matmul %27, %28, %cst_21 {dimension_numbers = #tpu.dot_dimension_numbers<[1], [0], [0], [1], [0, 0, 1, 1], [], []>} : vector<64x64xbf16>, vector<64x128xbf16>, vector<64x128xf32> -> vector<64x128xf32>
    %30 = vector.broadcast %3 : vector<64x1xf32> to vector<64x128xf32>
    %31 = arith.addf %29, %30 : vector<64x128xf32>
    %cst_22 = arith.constant 0.000000e+00 : f32
    %32 = vector.broadcast %cst_22 : f32 to vector<64x128xf32>
    %33 = arith.maximumf %31, %32 : vector<64x128xf32>
    %34 = vector.broadcast %4 : vector<64x1xf32> to vector<64x128xf32>
    %35 = arith.mulf %33, %34 : vector<64x128xf32>
    %cst_23 = arith.constant dense<0.000000e+00> : vector<128xf32>
    %36 = vector.multi_reduction <add>, %35, %cst_23 [0] : vector<64x128xf32> to vector<128xf32>
    %37 = vector.shape_cast %36 : vector<128xf32> to vector<1x128xf32>
    %38 = vector.broadcast %5 : vector<1x1xf32> to vector<1x128xf32>
    %39 = arith.addf %37, %38 : vector<1x128xf32>
    %c0_24 = arith.constant 0 : index
    %c0_25 = arith.constant 0 : index
    %40 = vector.load %arg7[%c0_24, %c0_25] : memref<1x128xf32, #tpu.memory_space<vmem>>, vector<1x128xf32>
    tpu.vector_store %arg7[%c0_24, %c0_25], %39 {strides = array<i32>} : memref<1x128xf32, #tpu.memory_space<vmem>>, vector<1x128xf32>,
    return
  }
  func.func @transform_0(%arg0: i32) -> (i32, i32) {
    %c0_i32 = arith.constant 0 : i32
    %c0_i32_0 = arith.constant 0 : i32
    return %arg0, %c0_i32 : i32, i32
  }
  func.func @transform_1(%arg0: i32) -> (i32, i32) {
    %c0_i32 = arith.constant 0 : i32
    %c0_i32_0 = arith.constant 0 : i32
    %c0_i32_1 = arith.constant 0 : i32
    return %c0_i32, %c0_i32_0 : i32, i32
  }
  func.func @transform_2(%arg0: i32) -> (i32, i32) {
    %c0_i32 = arith.constant 0 : i32
    %c0_i32_0 = arith.constant 0 : i32
    %c0_i32_1 = arith.constant 0 : i32
    return %c0_i32, %c0_i32_0 : i32, i32
  }
  func.func @transform_3(%arg0: i32) -> (i32, i32) {
    %c0_i32 = arith.constant 0 : i32
    %c0_i32_0 = arith.constant 0 : i32
    %c0_i32_1 = arith.constant 0 : i32
    return %c0_i32, %c0_i32_0 : i32, i32
  }
  func.func @transform_4(%arg0: i32) -> (i32, i32) {
    %c0_i32 = arith.constant 0 : i32
    %c0_i32_0 = arith.constant 0 : i32
    %c0_i32_1 = arith.constant 0 : i32
    return %c0_i32, %c0_i32_0 : i32, i32
  }
  func.func @transform_5(%arg0: i32) -> (i32, i32) {
    %c0_i32 = arith.constant 0 : i32
    %c0_i32_0 = arith.constant 0 : i32
    %c0_i32_1 = arith.constant 0 : i32
    return %c0_i32, %c0_i32_0 : i32, i32
  }
  func.func @transform_6(%arg0: i32) -> (i32, i32) {
    %c0_i32 = arith.constant 0 : i32
    %c0_i32_0 = arith.constant 0 : i32
    return %c0_i32, %arg0 : i32, i32
  }
}

module attributes {stable_mosaic.version = 11 : i64} {
  func.func @_mlp_kernel(%arg0: i32, %arg1: memref<128x32xbf16, #tpu.memory_space<vmem>>, %arg2: memref<128x32xbf16, #tpu.memory_space<vmem>>, %arg3: memref<128x128xbf16, #tpu.memory_space<vmem>>, %arg4: memref<64x128xbf16, #tpu.memory_space<vmem>>, %arg5: memref<64x64xbf16, #tpu.memory_space<vmem>>, %arg6: memref<128x6xf32, #tpu.memory_space<vmem>>, %arg7: memref<1x128xf32, #tpu.memory_space<vmem>>) attributes {dimension_semantics = [#tpu.dimension_semantics<parallel>], iteration_bounds = array<i64: 1>, scalar_prefetch = 0 : i64, scratch_operands = 0 : i64, tpu.core_type = #tpu.core_type<tc>, window_params = [{transform_indices = @transform_0, window_bounds = array<i64: 128, 32>}, {pipeline_mode = #tpu.pipeline_mode<synchronous>, transform_indices = @transform_1, window_bounds = array<i64: 128, 32>}, {pipeline_mode = #tpu.pipeline_mode<synchronous>, transform_indices = @transform_2, window_bounds = array<i64: 128, 128>}, {pipeline_mode = #tpu.pipeline_mode<synchronous>, transform_indices = @transform_3, window_bounds = array<i64: 64, 128>}, {pipeline_mode = #tpu.pipeline_mode<synchronous>, transform_indices = @transform_4, window_bounds = array<i64: 64, 64>}, {pipeline_mode = #tpu.pipeline_mode<synchronous>, transform_indices = @transform_5, window_bounds = array<i64: 128, 6>}, {transform_indices = @transform_6, window_bounds = array<i64: 1, 128>}]} {
    %c0 = arith.constant 0 : index
    %c0_0 = arith.constant 0 : index
    %0 = vector.load %arg6[%c0, %c0_0] : memref<128x6xf32, #tpu.memory_space<vmem>>, vector<128x1xf32>
    %c0_1 = arith.constant 0 : index
    %c1 = arith.constant 1 : index
    %1 = vector.load %arg6[%c0_1, %c1] : memref<128x6xf32, #tpu.memory_space<vmem>>, vector<128x1xf32>
    %c0_2 = arith.constant 0 : index
    %c2 = arith.constant 2 : index
    %2 = vector.load %arg6[%c0_2, %c2] : memref<128x6xf32, #tpu.memory_space<vmem>>, vector<64x1xf32>
    %c0_3 = arith.constant 0 : index
    %c3 = arith.constant 3 : index
    %3 = vector.load %arg6[%c0_3, %c3] : memref<128x6xf32, #tpu.memory_space<vmem>>, vector<64x1xf32>
    %c0_4 = arith.constant 0 : index
    %c4 = arith.constant 4 : index
    %4 = vector.load %arg6[%c0_4, %c4] : memref<128x6xf32, #tpu.memory_space<vmem>>, vector<64x1xf32>
    %c0_5 = arith.constant 0 : index
    %c5 = arith.constant 5 : index
    %5 = vector.load %arg6[%c0_5, %c5] : memref<128x6xf32, #tpu.memory_space<vmem>>, vector<1x1xf32>
    %c0_6 = arith.constant 0 : index
    %c0_7 = arith.constant 0 : index
    %6 = vector.load %arg1[%c0_6, %c0_7] : memref<128x32xbf16, #tpu.memory_space<vmem>>, vector<128x32xbf16>
    %c0_8 = arith.constant 0 : index
    %c0_9 = arith.constant 0 : index
    %7 = vector.load %arg2[%c0_8, %c0_9] : memref<128x32xbf16, #tpu.memory_space<vmem>>, vector<128x32xbf16>
    %cst = arith.constant dense<0.000000e+00> : vector<128x128xf32>
    %8 = tpu.matmul %7, %6, %cst {dimension_numbers = #tpu.dot_dimension_numbers<[1], [1], [0], [0], [0, 0, 1, 0], [], []>} : vector<128x32xbf16>, vector<128x32xbf16>, vector<128x128xf32> -> vector<128x128xf32>
    %9 = vector.broadcast %0 : vector<128x1xf32> to vector<128x128xf32>
    %10 = arith.addf %8, %9 : vector<128x128xf32>
    %cst_10 = arith.constant 0.000000e+00 : f32
    %11 = vector.broadcast %cst_10 : f32 to vector<128x128xf32>
    %12 = arith.maximumf %10, %11 : vector<128x128xf32>
    %c0_11 = arith.constant 0 : index
    %c0_12 = arith.constant 0 : index
    %13 = vector.load %arg3[%c0_11, %c0_12] : memref<128x128xbf16, #tpu.memory_space<vmem>>, vector<128x128xbf16>
    %14 = arith.truncf %12 : vector<128x128xf32> to vector<128x128xbf16>
    %cst_13 = arith.constant dense<0.000000e+00> : vector<128x128xf32>
    %15 = tpu.matmul %13, %14, %cst_13 {dimension_numbers = #tpu.dot_dimension_numbers<[1], [0], [0], [1], [0, 0, 1, 1], [], []>} : vector<128x128xbf16>, vector<128x128xbf16>, vector<128x128xf32> -> vector<128x128xf32>
    %16 = vector.broadcast %1 : vector<128x1xf32> to vector<128x128xf32>
    %17 = arith.addf %15, %16 : vector<128x128xf32>
    %cst_14 = arith.constant 0.000000e+00 : f32
    %18 = vector.broadcast %cst_14 : f32 to vector<128x128xf32>
    %19 = arith.maximumf %17, %18 : vector<128x128xf32>
    %c0_15 = arith.constant 0 : index
    %c0_16 = arith.constant 0 : index
    %20 = vector.load %arg4[%c0_15, %c0_16] : memref<64x128xbf16, #tpu.memory_space<vmem>>, vector<64x128xbf16>
    %21 = arith.truncf %19 : vector<128x128xf32> to vector<128x128xbf16>
    %cst_17 = arith.constant dense<0.000000e+00> : vector<64x128xf32>
    %22 = tpu.matmul %20, %21, %cst_17 {dimension_numbers = #tpu.dot_dimension_numbers<[1], [0], [0], [1], [0, 0, 1, 1], [], []>} : vector<64x128xbf16>, vector<128x128xbf16>, vector<64x128xf32> -> vector<64x128xf32>
    %23 = vector.broadcast %2 : vector<64x1xf32> to vector<64x128xf32>
    %24 = arith.addf %22, %23 : vector<64x128xf32>
    %cst_18 = arith.constant 0.000000e+00 : f32
    %25 = vector.broadcast %cst_18 : f32 to vector<64x128xf32>
    %26 = arith.maximumf %24, %25 : vector<64x128xf32>
    %c0_19 = arith.constant 0 : index
    %c0_20 = arith.constant 0 : index
    %27 = vector.load %arg5[%c0_19, %c0_20] : memref<64x64xbf16, #tpu.memory_space<vmem>>, vector<64x64xbf16>
    %28 = arith.truncf %26 : vector<64x128xf32> to vector<64x128xbf16>
    %cst_21 = arith.constant dense<0.000000e+00> : vector<64x128xf32>
    %29 = tpu.matmul %27, %28, %cst_21 {dimension_numbers = #tpu.dot_dimension_numbers<[1], [0], [0], [1], [0, 0, 1, 1], [], []>} : vector<64x64xbf16>, vector<64x128xbf16>, vector<64x128xf32> -> vector<64x128xf32>
    %30 = vector.broadcast %3 : vector<64x1xf32> to vector<64x128xf32>
    %31 = arith.addf %29, %30 : vector<64x128xf32>
    %cst_22 = arith.constant 0.000000e+00 : f32
    %32 = vector.broadcast %cst_22 : f32 to vector<64x128xf32>
    %33 = arith.maximumf %31, %32 : vector<64x128xf32>
    %34 = vector.broadcast %4 : vector<64x1xf32> to vector<64x128xf32>
    %35 = arith.mulf %33, %34 : vector<64x128xf32>
    %cst_23 = arith.constant dense<0.000000e+00> : vector<128xf32>
    %36 = vector.multi_reduction <add>, %35, %cst_23 [0] : vector<64x128xf32> to vector<128xf32>
    %37 = vector.shape_cast %36 : vector<128xf32> to vector<1x128xf32>
    %38 = vector.broadcast %5 : vector<1x1xf32> to vector<1x128xf32>
    %39 = arith.addf %37, %38 : vector<1x128xf32>
    %c0_24 = arith.constant 0 : index
    %c0_25 = arith.constant 0 : index
    %40 = vector.load %arg7[%c0_24, %c0_25] : memref<1x128xf32, #tpu.memory_space<vmem>>, vector<1x128xf32>
    tpu.vector_store %arg7[%c0_24, %c0_25], %39 {strides = array<i32>} : memref<1x128xf32, #tpu.memory_space<vmem>>, vector<1x128xf32>,
    return
  }
  func.func @transform_0(%arg0: i32) -> (i32, i32) {
    %c0_i32 = arith.constant 0 : i32
    %c0_i32_0 = arith.constant 0 : i32
    return %arg0, %c0_i32 : i32, i32
  }
  func.func @transform_1(%arg0: i32) -> (i32, i32) {
    %c0_i32 = arith.constant 0 : i32
    %c0_i32_0 = arith.constant 0 : i32
    %c0_i32_1 = arith.constant 0 : i32
    return %c0_i32, %c0_i32_0 : i32, i32
  }
  func.func @transform_2(%arg0: i32) -> (i32, i32) {
    %c0_i32 = arith.constant 0 : i32
    %c0_i32_0 = arith.constant 0 : i32
    %c0_i32_1 = arith.constant 0 : i32
    return %c0_i32, %c0_i32_0 : i32, i32
  }
  func.func @transform_3(%arg0: i32) -> (i32, i32) {
    %c0_i32 = arith.constant 0 : i32
    %c0_i32_0 = arith.constant 0 : i32
    %c0_i32_1 = arith.constant 0 : i32
    return %c0_i32, %c0_i32_0 : i32, i32
  }
  func.func @transform_4(%arg0: i32) -> (i32, i32) {
    %c0_i32 = arith.constant 0 : i32
    %c0_i32_0 = arith.constant 0 : i32
    %c0_i32_1 = arith.constant 0 : i32
    return %c0_i32, %c0_i32_0 : i32, i32
  }
  func.func @transform_5(%arg0: i32) -> (i32, i32) {
    %c0_i32 = arith.constant 0 : i32
    %c0_i32_0 = arith.constant 0 : i32
    %c0_i32_1 = arith.constant 0 : i32
    return %c0_i32, %c0_i32_0 : i32, i32
  }
  func.func @transform_6(%arg0: i32) -> (i32, i32) {
    %c0_i32 = arith.constant 0 : i32
    %c0_i32_0 = arith.constant 0 : i32
    return %c0_i32, %arg0 : i32, i32
  }
}

</mosaic_0001>

<llo_original>
// kernel: tpu_custom_call.1
$region0: #{tpu_custom_call.1}
  #allocation0 [shape = 'u32[]', space=smem, size = 0x4, offset = 0x4, fixed_abs, tag = 'smem constant byte address 0x4 - core index']
  #allocation1 [shape = 'u32[72,128]{1,0:T(1,128)}', space=vmem, size = 0x9000, scoped, tag = 'internal scratch']
  %s0 = inlined_call_operand.vmem [shape: bf16[128,32], index: 0, kind: input, shape index: {}]
  %s1 = inlined_call_operand.vmem [shape: bf16[128,32], index: 1, kind: input, shape index: {}]
  %s2 = inlined_call_operand.vmem [shape: bf16[128,128], index: 2, kind: input, shape index: {}]
  %s3 = inlined_call_operand.vmem [shape: bf16[64,128], index: 3, kind: input, shape index: {}]
  %s4 = inlined_call_operand.vmem [shape: bf16[64,64], index: 4, kind: input, shape index: {}]
  %s5 = inlined_call_operand.vmem [shape: f32[128,6], index: 5, kind: input, shape index: {}]
  %s6 = inlined_call_operand.hbm [shape: f32[1,128], index: 6, kind: output, shape index: {}]
  %s7 = sld [smem:[#allocation0]]
  $region34: #{tpu_custom_call.1} parent=0
    _
  %s9 = ssub.s32 1, %s7
  %s10 = scalar_select 0, %s9, %s7
  $region1: #{tpu_custom_call.1} parent=0
    #allocation2 [shape = 'u8[512]{0}', space=vmem, size = 0x400, scoped, tag = 'output window, operand 0, single buffered']
    #allocation3 [shape = 's32[1]{0}', space=sflag, size = 0x4, scoped, tag = 'scoped memory for tpu_custom_call.1']
    %11 = vsyncpa [#allocation3], 0
    // Predicated region
    $region2: #{tpu_custom_call.1} parent=1 // pred_check
      _
    $region3: #{tpu_custom_call.1} parent=1 // pred_check_branch
      %13 = sbr.rel (0) target = $region5
    $region4: #{tpu_custom_call.1} parent=1 // pred_region
      _
    $region5: #{tpu_custom_call.1} parent=1 // pred_fallthru
      _
    // Predicated region
    $region6: #{tpu_custom_call.1} parent=1 // pred_check
      _
    $region7: #{tpu_custom_call.1} parent=1 // pred_check_branch
      %15 = sbr.rel (0) target = $region9
    $region8: #{tpu_custom_call.1} parent=1 // pred_region
      _
    $region9: #{tpu_custom_call.1} parent=1 // pred_fallthru
      _
    // Predicated region
    $region10: #{tpu_custom_call.1} parent=1 // pred_check
      _
    $region11: #{tpu_custom_call.1} parent=1 // pred_check_branch
      %17 = sbr.rel (0) target = $region13
    $region12: #{tpu_custom_call.1} parent=1 // pred_region
      _
    $region13: #{tpu_custom_call.1} parent=1 // pred_fallthru
      _
    // Predicated region
    $region14: #{tpu_custom_call.1} parent=1 // pred_check
      _
    $region15: #{tpu_custom_call.1} parent=1 // pred_check_branch
      %19 = sbr.rel (0) target = $region17
    $region16: #{tpu_custom_call.1} parent=1 // pred_region
      _
    $region17: #{tpu_custom_call.1} parent=1 // pred_fallthru
      _
    // Predicated region
    $region18: #{tpu_custom_call.1} parent=1 // pred_check
      _
    $region19: #{tpu_custom_call.1} parent=1 // pred_check_branch
      %21 = sbr.rel (0) target = $region21
    $region20: #{tpu_custom_call.1} parent=1 // pred_region
      _
    $region21: #{tpu_custom_call.1} parent=1 // pred_fallthru
      _
    // Predicated region
    $region22: #{tpu_custom_call.1} parent=1 // pred_check
      _
    $region23: #{tpu_custom_call.1} parent=1 // pred_check_branch
      %23 = sbr.rel (0) target = $region25
    $region24: #{tpu_custom_call.1} parent=1 // pred_region
      _
    $region25: #{tpu_custom_call.1} parent=1 // pred_fallthru
      _
    %v25 = vld [vmem:[%s5] sm:$0xff]
    %v26 = vld [vmem:[%s5 + $0x8] sm:$0xff]
    %v27 = vld [vmem:[%s5 + $0x10] sm:$0xff]
    %v28 = vld [vmem:[%s5 + $0x18] sm:$0xff]
    %v29 = vld [vmem:[%s5 + $0x20] sm:$0xff]
    %v30 = vld [vmem:[%s5 + $0x28] sm:$0xff]
    %v31 = vld [vmem:[%s5 + $0x30] sm:$0xff]
    %v32 = vld [vmem:[%s5 + $0x38] sm:$0xff]
    %v33 = vld [vmem:[%s5 + $0x40] sm:$0xff]
    %v34 = vld [vmem:[%s5 + $0x48] sm:$0xff]
    %v35 = vld [vmem:[%s5 + $0x50] sm:$0xff]
    %v36 = vld [vmem:[%s5 + $0x58] sm:$0xff]
    %v37 = vld [vmem:[%s5 + $0x60] sm:$0xff]
    %v38 = vld [vmem:[%s5 + $0x68] sm:$0xff]
    %v39 = vld [vmem:[%s5 + $0x70] sm:$0xff]
    %v40 = vld [vmem:[%s5 + $0x78] sm:$0xff]
    %v41 = vld [vmem:[%s5] sm:$0x1]
    %v42 = vld [vmem:[%s0] sm:$0xf]
    %v43 = vld [vmem:[%s0 + $0x4] sm:$0xf]
    %v44 = vld [vmem:[%s0 + $0x8] sm:$0xf]
    %v45 = vld [vmem:[%s0 + $0xc] sm:$0xf]
    %v46 = vld [vmem:[%s0 + $0x10] sm:$0xf]
    %v47 = vld [vmem:[%s0 + $0x14] sm:$0xf]
    %v48 = vld [vmem:[%s0 + $0x18] sm:$0xf]
    %v49 = vld [vmem:[%s0 + $0x1c] sm:$0xf]
    %v50 = vld [vmem:[%s0 + $0x20] sm:$0xf]
    %v51 = vld [vmem:[%s0 + $0x24] sm:$0xf]
    %v52 = vld [vmem:[%s0 + $0x28] sm:$0xf]
    %v53 = vld [vmem:[%s0 + $0x2c] sm:$0xf]
    %v54 = vld [vmem:[%s0 + $0x30] sm:$0xf]
    %v55 = vld [vmem:[%s0 + $0x34] sm:$0xf]
    %v56 = vld [vmem:[%s0 + $0x38] sm:$0xf]
    %v57 = vld [vmem:[%s0 + $0x3c] sm:$0xf]
    %v58 = vld [vmem:[%s1] sm:$0xf]
    %v59 = vld [vmem:[%s1 + $0x4] sm:$0xf]
    %v60 = vld [vmem:[%s1 + $0x8] sm:$0xf]
    %v61 = vld [vmem:[%s1 + $0xc] sm:$0xf]
    %v62 = vld [vmem:[%s1 + $0x10] sm:$0xf]
    %v63 = vld [vmem:[%s1 + $0x14] sm:$0xf]
    %v64 = vld [vmem:[%s1 + $0x18] sm:$0xf]
    %v65 = vld [vmem:[%s1 + $0x1c] sm:$0xf]
    %v66 = vld [vmem:[%s1 + $0x20] sm:$0xf]
    %v67 = vld [vmem:[%s1 + $0x24] sm:$0xf]
    %v68 = vld [vmem:[%s1 + $0x28] sm:$0xf]
    %v69 = vld [vmem:[%s1 + $0x2c] sm:$0xf]
    %v70 = vld [vmem:[%s1 + $0x30] sm:$0xf]
    %v71 = vld [vmem:[%s1 + $0x34] sm:$0xf]
    %v72 = vld [vmem:[%s1 + $0x38] sm:$0xf]
    %v73 = vld [vmem:[%s1 + $0x3c] sm:$0xf]
    %75 = vset.pattern.permute.xlu0 0
    %76 = vperm.xlu0 %75, %v25
    %v77 = vpop.permute.xlu0 %76
    %80 = vset.pattern.permute.xlu0 0
    %81 = vperm.xlu0 %80, %v26
    %v82 = vpop.permute.xlu0 %81
    %85 = vset.pattern.permute.xlu0 0
    %86 = vperm.xlu0 %85, %v27
    %v87 = vpop.permute.xlu0 %86
    %90 = vset.pattern.permute.xlu0 0
    %91 = vperm.xlu0 %90, %v28
    %v92 = vpop.permute.xlu0 %91
    %95 = vset.pattern.permute.xlu0 0
    %96 = vperm.xlu0 %95, %v29
    %v97 = vpop.permute.xlu0 %96
    %100 = vset.pattern.permute.xlu0 0
    %101 = vperm.xlu0 %100, %v30
    %v102 = vpop.permute.xlu0 %101
    %105 = vset.pattern.permute.xlu0 0
    %106 = vperm.xlu0 %105, %v31
    %v107 = vpop.permute.xlu0 %106
    %110 = vset.pattern.permute.xlu0 0
    %111 = vperm.xlu0 %110, %v32
    %v112 = vpop.permute.xlu0 %111
    %115 = vset.pattern.permute.xlu0 0
    %116 = vperm.xlu0 %115, %v33
    %v117 = vpop.permute.xlu0 %116
    %120 = vset.pattern.permute.xlu0 0
    %121 = vperm.xlu0 %120, %v34
    %v122 = vpop.permute.xlu0 %121
    %125 = vset.pattern.permute.xlu0 0
    %126 = vperm.xlu0 %125, %v35
    %v127 = vpop.permute.xlu0 %126
    %130 = vset.pattern.permute.xlu0 0
    %131 = vperm.xlu0 %130, %v36
    %v132 = vpop.permute.xlu0 %131
    %135 = vset.pattern.permute.xlu0 0
    %136 = vperm.xlu0 %135, %v37
    %v137 = vpop.permute.xlu0 %136
    %140 = vset.pattern.permute.xlu0 0
    %141 = vperm.xlu0 %140, %v38
    %v142 = vpop.permute.xlu0 %141
    %145 = vset.pattern.permute.xlu0 0
    %146 = vperm.xlu0 %145, %v39
    %v147 = vpop.permute.xlu0 %146
    %150 = vset.pattern.permute.xlu0 0
    %151 = vperm.xlu0 %150, %v40
    %v152 = vpop.permute.xlu0 %151
    %v170 = vunpack.c.l.b16 %v58
    %v171 = vunpack.c.l.b16 %v59
    %v172 = vunpack.c.l.b16 %v60
    %v173 = vunpack.c.l.b16 %v61
    %v174 = vunpack.c.l.b16 %v62
    %v175 = vunpack.c.l.b16 %v63
    %v176 = vunpack.c.l.b16 %v64
    %v177 = vunpack.c.l.b16 %v65
    %v178 = vunpack.c.l.b16 %v66
    %v179 = vunpack.c.l.b16 %v67
    %v180 = vunpack.c.l.b16 %v68
    %v181 = vunpack.c.l.b16 %v69
    %v182 = vunpack.c.l.b16 %v70
    %v183 = vunpack.c.l.b16 %v71
    %v184 = vunpack.c.l.b16 %v72
    %v185 = vunpack.c.l.b16 %v73
    %v186 = vpack.c.b16 %v171, %v170
    %v187 = vpack.c.b16 %v173, %v172
    %v188 = vpack.c.b16 %v175, %v174
    %v189 = vpack.c.b16 %v177, %v176
    %v190 = vpack.c.b16 %v179, %v178
    %v191 = vpack.c.b16 %v181, %v180
    %v192 = vpack.c.b16 %v183, %v182
    %v193 = vpack.c.b16 %v185, %v184
    %v210 = vunpack.c.l.b16 %v42
    %v211 = vunpack.c.l.b16 %v43
    %v212 = vunpack.c.l.b16 %v44
    %v213 = vunpack.c.l.b16 %v45
    %v214 = vunpack.c.l.b16 %v46
    %v215 = vunpack.c.l.b16 %v47
    %v216 = vunpack.c.l.b16 %v48
    %v217 = vunpack.c.l.b16 %v49
    %v218 = vunpack.c.l.b16 %v50
    %v219 = vunpack.c.l.b16 %v51
    %v220 = vunpack.c.l.b16 %v52
    %v221 = vunpack.c.l.b16 %v53
    %v222 = vunpack.c.l.b16 %v54
    %v223 = vunpack.c.l.b16 %v55
    %v224 = vunpack.c.l.b16 %v56
    %v225 = vunpack.c.l.b16 %v57
    %v226 = vpack.c.b16 %v211, %v210
    %v227 = vpack.c.b16 %v213, %v212
    %v228 = vpack.c.b16 %v215, %v214
    %v229 = vpack.c.b16 %v217, %v216
    %v230 = vpack.c.b16 %v219, %v218
    %v231 = vpack.c.b16 %v221, %v220
    %v232 = vpack.c.b16 %v223, %v222
    %v233 = vpack.c.b16 %v225, %v224
    %vm234 = vcmask 261120
    %v236 = vsel %vm234, %v186, 0
    %v239 = vsel %vm234, %v187, 0
    %v242 = vsel %vm234, %v188, 0
    %v245 = vsel %vm234, %v189, 0
    %v248 = vsel %vm234, %v190, 0
    %v251 = vsel %vm234, %v191, 0
    %v254 = vsel %vm234, %v192, 0
    %v257 = vsel %vm234, %v193, 0
    %v260 = vsel %vm234, %v226, 0
    %v263 = vsel %vm234, %v227, 0
    %v266 = vsel %vm234, %v228, 0
    %v269 = vsel %vm234, %v229, 0
    %v272 = vsel %vm234, %v230, 0
    %v275 = vsel %vm234, %v231, 0
    %v278 = vsel %vm234, %v232, 0
    %v281 = vsel %vm234, %v233, 0
    %283 = vmatpush.bf16.xpose.msra.mxu0 %v281
    %284 = vmatpush.bf16.xpose.msra.mxu0 %v278
    %285 = vmatpush.bf16.xpose.msra.mxu0 %v275
    %286 = vmatpush.bf16.xpose.msra.mxu0 %v272
    %287 = vmatpush.bf16.xpose.msra.mxu0 %v269
    %288 = vmatpush.bf16.xpose.msra.mxu0 %v266
    %289 = vmatpush.bf16.xpose.msra.mxu0 %v263
    %290 = vmatpush.bf16.xpose.msra.mxu0 %v260
    %291 = vmatmul.bf16.gmra.mxu0 %v236
    %v292 = vpop.f32.mrf.mxu0
    %v293 = vadd.f32 %v77, %v292
    %v294 = vpop.f32.mrf.mxu0
    %v295 = vadd.f32 %v82, %v294
    %296 = vmatmul.bf16.gmra.mxu0 %v239
    %v297 = vpop.f32.mrf.mxu0
    %v298 = vadd.f32 %v87, %v297
    %v299 = vpop.f32.mrf.mxu0
    %v300 = vadd.f32 %v92, %v299
    %301 = vmatmul.bf16.gmra.mxu0 %v242
    %v302 = vpop.f32.mrf.mxu0
    %v303 = vadd.f32 %v97, %v302
    %v304 = vpop.f32.mrf.mxu0
    %v305 = vadd.f32 %v102, %v304
    %306 = vmatmul.bf16.gmra.mxu0 %v245
    %v307 = vpop.f32.mrf.mxu0
    %v308 = vadd.f32 %v107, %v307
    %v309 = vpop.f32.mrf.mxu0
    %v310 = vadd.f32 %v112, %v309
    %311 = vmatmul.bf16.gmra.mxu0 %v248
    %v312 = vpop.f32.mrf.mxu0
    %v313 = vadd.f32 %v117, %v312
    %v314 = vpop.f32.mrf.mxu0
    %v315 = vadd.f32 %v122, %v314
    %316 = vmatmul.bf16.gmra.mxu0 %v251
    %v317 = vpop.f32.mrf.mxu0
    %v318 = vadd.f32 %v127, %v317
    %v319 = vpop.f32.mrf.mxu0
    %v320 = vadd.f32 %v132, %v319
    %321 = vmatmul.bf16.gmra.mxu0 %v254
    %v322 = vpop.f32.mrf.mxu0
    %v323 = vadd.f32 %v137, %v322
    %v324 = vpop.f32.mrf.mxu0
    %v325 = vadd.f32 %v142, %v324
    %326 = vmatmul.bf16.gmra.mxu0 %v257
    %v327 = vpop.f32.mrf.mxu0
    %v328 = vadd.f32 %v147, %v327
    %v329 = vpop.f32.mrf.mxu0
    %v330 = vadd.f32 %v152, %v329
    %331 = vdwg.mxu0
    %v332 = vmax.f32 %v293, 0.0
    %v333 = vmax.f32 %v295, 0.0
    %v334 = vmax.f32 %v298, 0.0
    %v335 = vmax.f32 %v300, 0.0
    %v336 = vmax.f32 %v303, 0.0
    %v337 = vmax.f32 %v305, 0.0
    %v338 = vmax.f32 %v308, 0.0
    %v339 = vmax.f32 %v310, 0.0
    %v340 = vmax.f32 %v313, 0.0
    %v341 = vmax.f32 %v315, 0.0
    %v342 = vmax.f32 %v318, 0.0
    %v343 = vmax.f32 %v320, 0.0
    %v344 = vmax.f32 %v323, 0.0
    %v345 = vmax.f32 %v325, 0.0
    %v346 = vmax.f32 %v328, 0.0
    %v347 = vmax.f32 %v330, 0.0
    %v348 = vld [vmem:[%s2] sm:$0xf]
    %v349 = vld [vmem:[%s2 + $0x4] sm:$0xf]
    %v350 = vld [vmem:[%s2 + $0x8] sm:$0xf]
    %v351 = vld [vmem:[%s2 + $0xc] sm:$0xf]
    %v352 = vld [vmem:[%s2 + $0x10] sm:$0xf]
    %v353 = vld [vmem:[%s2 + $0x14] sm:$0xf]
    %v354 = vld [vmem:[%s2 + $0x18] sm:$0xf]
    %v355 = vld [vmem:[%s2 + $0x1c] sm:$0xf]
    %v356 = vld [vmem:[%s2 + $0x20] sm:$0xf]
    %v357 = vld [vmem:[%s2 + $0x24] sm:$0xf]
    %v358 = vld [vmem:[%s2 + $0x28] sm:$0xf]
    %v359 = vld [vmem:[%s2 + $0x2c] sm:$0xf]
    %v360 = vld [vmem:[%s2 + $0x30] sm:$0xf]
    %v361 = vld [vmem:[%s2 + $0x34] sm:$0xf]
    %v362 = vld [vmem:[%s2 + $0x38] sm:$0xf]
    %v363 = vld [vmem:[%s2 + $0x3c] sm:$0xf]
    %v364 = vpack.c.bf16 %v333, %v332
    %v365 = vpack.c.bf16 %v335, %v334
    %v366 = vpack.c.bf16 %v337, %v336
    %v367 = vpack.c.bf16 %v339, %v338
    %v368 = vpack.c.bf16 %v341, %v340
    %v369 = vpack.c.bf16 %v343, %v342
    %v370 = vpack.c.bf16 %v345, %v344
    %v371 = vpack.c.bf16 %v347, %v346
    %372 = vset.pattern.permute.xlu0 1
    %373 = vperm.xlu0 %372, %v25
    %v374 = vpop.permute.xlu0 %373
    %376 = vset.pattern.permute.xlu0 1
    %377 = vperm.xlu0 %376, %v26
    %v378 = vpop.permute.xlu0 %377
    %380 = vset.pattern.permute.xlu0 1
    %381 = vperm.xlu0 %380, %v27
    %v382 = vpop.permute.xlu0 %381
    %384 = vset.pattern.permute.xlu0 1
    %385 = vperm.xlu0 %384, %v28
    %v386 = vpop.permute.xlu0 %385
    %388 = vset.pattern.permute.xlu0 1
    %389 = vperm.xlu0 %388, %v29
    %v390 = vpop.permute.xlu0 %389
    %392 = vset.pattern.permute.xlu0 1
    %393 = vperm.xlu0 %392, %v30
    %v394 = vpop.permute.xlu0 %393
    %396 = vset.pattern.permute.xlu0 1
    %397 = vperm.xlu0 %396, %v31
    %v398 = vpop.permute.xlu0 %397
    %400 = vset.pattern.permute.xlu0 1
    %401 = vperm.xlu0 %400, %v32
    %v402 = vpop.permute.xlu0 %401
    %404 = vset.pattern.permute.xlu0 1
    %405 = vperm.xlu0 %404, %v33
    %v406 = vpop.permute.xlu0 %405
    %408 = vset.pattern.permute.xlu0 1
    %409 = vperm.xlu0 %408, %v34
    %v410 = vpop.permute.xlu0 %409
    %412 = vset.pattern.permute.xlu0 1
    %413 = vperm.xlu0 %412, %v35
    %v414 = vpop.permute.xlu0 %413
    %416 = vset.pattern.permute.xlu0 1
    %417 = vperm.xlu0 %416, %v36
    %v418 = vpop.permute.xlu0 %417
    %420 = vset.pattern.permute.xlu0 1
    %421 = vperm.xlu0 %420, %v37
    %v422 = vpop.permute.xlu0 %421
    %424 = vset.pattern.permute.xlu0 1
    %425 = vperm.xlu0 %424, %v38
    %v426 = vpop.permute.xlu0 %425
    %428 = vset.pattern.permute.xlu0 1
    %429 = vperm.xlu0 %428, %v39
    %v430 = vpop.permute.xlu0 %429
    %432 = vset.pattern.permute.xlu0 1
    %433 = vperm.xlu0 %432, %v40
    %v434 = vpop.permute.xlu0 %433
    %v452 = vunpack.c.l.b16 %v348
    %v453 = vunpack.c.l.b16 %v349
    %v454 = vunpack.c.l.b16 %v350
    %v455 = vunpack.c.l.b16 %v351
    %v456 = vunpack.c.l.b16 %v352
    %v457 = vunpack.c.l.b16 %v353
    %v458 = vunpack.c.l.b16 %v354
    %v459 = vunpack.c.l.b16 %v355
    %v460 = vunpack.c.l.b16 %v356
    %v461 = vunpack.c.l.b16 %v357
    %v462 = vunpack.c.l.b16 %v358
    %v463 = vunpack.c.l.b16 %v359
    %v464 = vunpack.c.l.b16 %v360
    %v465 = vunpack.c.l.b16 %v361
    %v466 = vunpack.c.l.b16 %v362
    %v467 = vunpack.c.l.b16 %v363
    %v468 = vpack.c.b16 %v453, %v452
    %v469 = vpack.c.b16 %v455, %v454
    %v470 = vpack.c.b16 %v457, %v456
    %v471 = vpack.c.b16 %v459, %v458
    %v472 = vpack.c.b16 %v461, %v460
    %v473 = vpack.c.b16 %v463, %v462
    %v474 = vpack.c.b16 %v465, %v464
    %v475 = vpack.c.b16 %v467, %v466
    %484 = vmatpush.bf16.msra.mxu0 %v371
    %485 = vmatpush.bf16.msra.mxu0 %v370
    %486 = vmatpush.bf16.msra.mxu0 %v369
    %487 = vmatpush.bf16.msra.mxu0 %v368
    %488 = vmatpush.bf16.msra.mxu0 %v367
    %489 = vmatpush.bf16.msra.mxu0 %v366
    %490 = vmatpush.bf16.msra.mxu0 %v365
    %491 = vmatpush.bf16.msra.mxu0 %v364
    %492 = vmatmul.bf16.gmra.mxu0 %v468
    %v493 = vpop.f32.mrf.mxu0
    %v494 = vadd.f32 %v374, %v493
    %v495 = vpop.f32.mrf.mxu0
    %v496 = vadd.f32 %v378, %v495
    %497 = vmatmul.bf16.gmra.mxu0 %v469
    %v498 = vpop.f32.mrf.mxu0
    %v499 = vadd.f32 %v382, %v498
    %v500 = vpop.f32.mrf.mxu0
    %v501 = vadd.f32 %v386, %v500
    %502 = vmatmul.bf16.gmra.mxu0 %v470
    %v503 = vpop.f32.mrf.mxu0
    %v504 = vadd.f32 %v390, %v503
    %v505 = vpop.f32.mrf.mxu0
    %v506 = vadd.f32 %v394, %v505
    %507 = vmatmul.bf16.gmra.mxu0 %v471
    %v508 = vpop.f32.mrf.mxu0
    %v509 = vadd.f32 %v398, %v508
    %v510 = vpop.f32.mrf.mxu0
    %v511 = vadd.f32 %v402, %v510
    %512 = vmatmul.bf16.gmra.mxu0 %v472
    %v513 = vpop.f32.mrf.mxu0
    %v514 = vadd.f32 %v406, %v513
    %v515 = vpop.f32.mrf.mxu0
    %v516 = vadd.f32 %v410, %v515
    %517 = vmatmul.bf16.gmra.mxu0 %v473
    %v518 = vpop.f32.mrf.mxu0
    %v519 = vadd.f32 %v414, %v518
    %v520 = vpop.f32.mrf.mxu0
    %v521 = vadd.f32 %v418, %v520
    %522 = vmatmul.bf16.gmra.mxu0 %v474
    %v523 = vpop.f32.mrf.mxu0
    %v524 = vadd.f32 %v422, %v523
    %v525 = vpop.f32.mrf.mxu0
    %v526 = vadd.f32 %v426, %v525
    %527 = vmatmul.bf16.gmra.mxu0 %v475
    %v528 = vpop.f32.mrf.mxu0
    %v529 = vadd.f32 %v430, %v528
    %v530 = vpop.f32.mrf.mxu0
    %v531 = vadd.f32 %v434, %v530
    %532 = vdwg.mxu0
    %v533 = vmax.f32 %v494, 0.0
    %v534 = vmax.f32 %v496, 0.0
    %v535 = vmax.f32 %v499, 0.0
    %v536 = vmax.f32 %v501, 0.0
    %v537 = vmax.f32 %v504, 0.0
    %v538 = vmax.f32 %v506, 0.0
    %v539 = vmax.f32 %v509, 0.0
    %v540 = vmax.f32 %v511, 0.0
    %v541 = vmax.f32 %v514, 0.0
    %v542 = vmax.f32 %v516, 0.0
    %v543 = vmax.f32 %v519, 0.0
    %v544 = vmax.f32 %v521, 0.0
    %v545 = vmax.f32 %v524, 0.0
    %v546 = vmax.f32 %v526, 0.0
    %v547 = vmax.f32 %v529, 0.0
    %v548 = vmax.f32 %v531, 0.0
    %v549 = vld [vmem:[%s3] sm:$0xf]
    %v550 = vld [vmem:[%s3 + $0x4] sm:$0xf]
    %v551 = vld [vmem:[%s3 + $0x8] sm:$0xf]
    %v552 = vld [vmem:[%s3 + $0xc] sm:$0xf]
    %v553 = vld [vmem:[%s3 + $0x10] sm:$0xf]
    %v554 = vld [vmem:[%s3 + $0x14] sm:$0xf]
    %v555 = vld [vmem:[%s3 + $0x18] sm:$0xf]
    %v556 = vld [vmem:[%s3 + $0x1c] sm:$0xf]
    %v557 = vpack.c.bf16 %v534, %v533
    %v558 = vpack.c.bf16 %v536, %v535
    %v559 = vpack.c.bf16 %v538, %v537
    %v560 = vpack.c.bf16 %v540, %v539
    %v561 = vpack.c.bf16 %v542, %v541
    %v562 = vpack.c.bf16 %v544, %v543
    %v563 = vpack.c.bf16 %v546, %v545
    %v564 = vpack.c.bf16 %v548, %v547
    %565 = vset.pattern.permute.xlu0 2
    %566 = vperm.xlu0 %565, %v25
    %v567 = vpop.permute.xlu0 %566
    %569 = vset.pattern.permute.xlu0 2
    %570 = vperm.xlu0 %569, %v26
    %v571 = vpop.permute.xlu0 %570
    %573 = vset.pattern.permute.xlu0 2
    %574 = vperm.xlu0 %573, %v27
    %v575 = vpop.permute.xlu0 %574
    %577 = vset.pattern.permute.xlu0 2
    %578 = vperm.xlu0 %577, %v28
    %v579 = vpop.permute.xlu0 %578
    %581 = vset.pattern.permute.xlu0 2
    %582 = vperm.xlu0 %581, %v29
    %v583 = vpop.permute.xlu0 %582
    %585 = vset.pattern.permute.xlu0 2
    %586 = vperm.xlu0 %585, %v30
    %v587 = vpop.permute.xlu0 %586
    %589 = vset.pattern.permute.xlu0 2
    %590 = vperm.xlu0 %589, %v31
    %v591 = vpop.permute.xlu0 %590
    %593 = vset.pattern.permute.xlu0 2
    %594 = vperm.xlu0 %593, %v32
    %v595 = vpop.permute.xlu0 %594
    %v605 = vunpack.c.l.b16 %v549
    %v606 = vunpack.c.l.b16 %v550
    %v607 = vunpack.c.l.b16 %v551
    %v608 = vunpack.c.l.b16 %v552
    %v609 = vunpack.c.l.b16 %v553
    %v610 = vunpack.c.l.b16 %v554
    %v611 = vunpack.c.l.b16 %v555
    %v612 = vunpack.c.l.b16 %v556
    %v613 = vpack.c.b16 %v606, %v605
    %v614 = vpack.c.b16 %v608, %v607
    %v615 = vpack.c.b16 %v610, %v609
    %v616 = vpack.c.b16 %v612, %v611
    %621 = vmatpush.bf16.msra.mxu0 %v564
    %622 = vmatpush.bf16.msra.mxu0 %v563
    %623 = vmatpush.bf16.msra.mxu0 %v562
    %624 = vmatpush.bf16.msra.mxu0 %v561
    %625 = vmatpush.bf16.msra.mxu0 %v560
    %626 = vmatpush.bf16.msra.mxu0 %v559
    %627 = vmatpush.bf16.msra.mxu0 %v558
    %628 = vmatpush.bf16.msra.mxu0 %v557
    %629 = vmatmul.bf16.gmra.mxu0 %v613
    %v630 = vpop.f32.mrf.mxu0
    %v631 = vadd.f32 %v567, %v630
    %v632 = vpop.f32.mrf.mxu0
    %v633 = vadd.f32 %v571, %v632
    %634 = vmatmul.bf16.gmra.mxu0 %v614
    %v635 = vpop.f32.mrf.mxu0
    %v636 = vadd.f32 %v575, %v635
    %v637 = vpop.f32.mrf.mxu0
    %v638 = vadd.f32 %v579, %v637
    %639 = vmatmul.bf16.gmra.mxu0 %v615
    %v640 = vpop.f32.mrf.mxu0
    %v641 = vadd.f32 %v583, %v640
    %v642 = vpop.f32.mrf.mxu0
    %v643 = vadd.f32 %v587, %v642
    %644 = vmatmul.bf16.gmra.mxu0 %v616
    %v645 = vpop.f32.mrf.mxu0
    %v646 = vadd.f32 %v591, %v645
    %v647 = vpop.f32.mrf.mxu0
    %v648 = vadd.f32 %v595, %v647
    %649 = vdwg.mxu0
    %v650 = vmax.f32 %v631, 0.0
    %v651 = vmax.f32 %v633, 0.0
    %v652 = vmax.f32 %v636, 0.0
    %v653 = vmax.f32 %v638, 0.0
    %v654 = vmax.f32 %v641, 0.0
    %v655 = vmax.f32 %v643, 0.0
    %v656 = vmax.f32 %v646, 0.0
    %v657 = vmax.f32 %v648, 0.0
    %v658 = vld [vmem:[%s4] sm:$0xf]
    %v659 = vld [vmem:[%s4 + $0x4] sm:$0xf]
    %v660 = vld [vmem:[%s4 + $0x8] sm:$0xf]
    %v661 = vld [vmem:[%s4 + $0xc] sm:$0xf]
    %v662 = vld [vmem:[%s4 + $0x10] sm:$0xf]
    %v663 = vld [vmem:[%s4 + $0x14] sm:$0xf]
    %v664 = vld [vmem:[%s4 + $0x18] sm:$0xf]
    %v665 = vld [vmem:[%s4 + $0x1c] sm:$0xf]
    %v666 = vpack.c.bf16 %v651, %v650
    %v667 = vpack.c.bf16 %v653, %v652
    %v668 = vpack.c.bf16 %v655, %v654
    %v669 = vpack.c.bf16 %v657, %v656
    %670 = vset.pattern.permute.xlu0 3
    %671 = vperm.xlu0 %670, %v25
    %v672 = vpop.permute.xlu0 %671
    %674 = vset.pattern.permute.xlu0 3
    %675 = vperm.xlu0 %674, %v26
    %v676 = vpop.permute.xlu0 %675
    %678 = vset.pattern.permute.xlu0 3
    %679 = vperm.xlu0 %678, %v27
    %v680 = vpop.permute.xlu0 %679
    %682 = vset.pattern.permute.xlu0 3
    %683 = vperm.xlu0 %682, %v28
    %v684 = vpop.permute.xlu0 %683
    %686 = vset.pattern.permute.xlu0 3
    %687 = vperm.xlu0 %686, %v29
    %v688 = vpop.permute.xlu0 %687
    %690 = vset.pattern.permute.xlu0 3
    %691 = vperm.xlu0 %690, %v30
    %v692 = vpop.permute.xlu0 %691
    %694 = vset.pattern.permute.xlu0 3
    %695 = vperm.xlu0 %694, %v31
    %v696 = vpop.permute.xlu0 %695
    %698 = vset.pattern.permute.xlu0 3
    %699 = vperm.xlu0 %698, %v32
    %v700 = vpop.permute.xlu0 %699
    %v710 = vunpack.c.l.b16 %v658
    %v711 = vunpack.c.l.b16 %v659
    %v712 = vunpack.c.l.b16 %v660
    %v713 = vunpack.c.l.b16 %v661
    %v714 = vunpack.c.l.b16 %v662
    %v715 = vunpack.c.l.b16 %v663
    %v716 = vunpack.c.l.b16 %v664
    %v717 = vunpack.c.l.b16 %v665
    %v718 = vpack.c.b16 %v711, %v710
    %v719 = vpack.c.b16 %v713, %v712
    %v720 = vpack.c.b16 %v715, %v714
    %v721 = vpack.c.b16 %v717, %v716
    %vm722 = vcmask 523264
    %v724 = vsel %vm722, %v718, 0
    %v727 = vsel %vm722, %v719, 0
    %v730 = vsel %vm722, %v720, 0
    %v733 = vsel %vm722, %v721, 0
    %735 = vmatpush.bf16.msra.mxu0 0
    %736 = vmatpush.bf16.msra.mxu0 0
    %737 = vmatpush.bf16.msra.mxu0 0
    %738 = vmatpush.bf16.msra.mxu0 0
    %739 = vmatpush.bf16.msra.mxu0 %v669
    %740 = vmatpush.bf16.msra.mxu0 %v668
    %741 = vmatpush.bf16.msra.mxu0 %v667
    %742 = vmatpush.bf16.msra.mxu0 %v666
    %743 = vmatmul.bf16.gmra.mxu0 %v724
    %v744 = vpop.f32.mrf.mxu0
    %v745 = vadd.f32 %v672, %v744
    %v746 = vpop.f32.mrf.mxu0
    %v747 = vadd.f32 %v676, %v746
    %748 = vmatmul.bf16.gmra.mxu0 %v727
    %v749 = vpop.f32.mrf.mxu0
    %v750 = vadd.f32 %v680, %v749
    %v751 = vpop.f32.mrf.mxu0
    %v752 = vadd.f32 %v684, %v751
    %753 = vmatmul.bf16.gmra.mxu0 %v730
    %v754 = vpop.f32.mrf.mxu0
    %v755 = vadd.f32 %v688, %v754
    %v756 = vpop.f32.mrf.mxu0
    %v757 = vadd.f32 %v692, %v756
    %758 = vmatmul.bf16.gmra.mxu0 %v733
    %v759 = vpop.f32.mrf.mxu0
    %v760 = vadd.f32 %v696, %v759
    %v761 = vpop.f32.mrf.mxu0
    %v762 = vadd.f32 %v700, %v761
    %763 = vdwg.mxu0
    %v764 = vmax.f32 %v745, 0.0
    %v765 = vmax.f32 %v747, 0.0
    %v766 = vmax.f32 %v750, 0.0
    %v767 = vmax.f32 %v752, 0.0
    %v768 = vmax.f32 %v755, 0.0
    %v769 = vmax.f32 %v757, 0.0
    %v770 = vmax.f32 %v760, 0.0
    %v771 = vmax.f32 %v762, 0.0
    %772 = vset.pattern.permute.xlu0 4
    %773 = vperm.xlu0 %772, %v25
    %v774 = vpop.permute.xlu0 %773
    %776 = vset.pattern.permute.xlu0 4
    %777 = vperm.xlu0 %776, %v26
    %v778 = vpop.permute.xlu0 %777
    %780 = vset.pattern.permute.xlu0 4
    %781 = vperm.xlu0 %780, %v27
    %v782 = vpop.permute.xlu0 %781
    %784 = vset.pattern.permute.xlu0 4
    %785 = vperm.xlu0 %784, %v28
    %v786 = vpop.permute.xlu0 %785
    %788 = vset.pattern.permute.xlu0 4
    %789 = vperm.xlu0 %788, %v29
    %v790 = vpop.permute.xlu0 %789
    %792 = vset.pattern.permute.xlu0 4
    %793 = vperm.xlu0 %792, %v30
    %v794 = vpop.permute.xlu0 %793
    %796 = vset.pattern.permute.xlu0 4
    %797 = vperm.xlu0 %796, %v31
    %v798 = vpop.permute.xlu0 %797
    %800 = vset.pattern.permute.xlu0 4
    %801 = vperm.xlu0 %800, %v32
    %v802 = vpop.permute.xlu0 %801
    %v804 = vmul.f32 %v764, %v774
    %v805 = vmul.f32 %v765, %v778
    %v806 = vmul.f32 %v766, %v782
    %v807 = vmul.f32 %v767, %v786
    %v808 = vmul.f32 %v768, %v790
    %v809 = vmul.f32 %v769, %v794
    %v810 = vmul.f32 %v770, %v798
    %v811 = vmul.f32 %v771, %v802
    %v812 = vadd.f32 %v804, %v805
    %v813 = vadd.f32 %v812, %v806
    %v814 = vadd.f32 %v813, %v807
    %v815 = vadd.f32 %v814, %v808
    %v816 = vadd.f32 %v815, %v809
    %v817 = vadd.f32 %v816, %v810
    %v818 = vadd.f32 %v817, %v811
    %v819 = vrot.slane %v818, 4
    %v820 = vadd.f32 %v818, %v819
    %v821 = vrot.slane %v820, 2
    %v822 = vadd.f32 %v820, %v821
    %v823 = vrot.slane %v822, 1
    %v824 = vadd.f32 %v822, %v823
    %826 = vset.pattern.permute.xlu0 5
    %827 = vperm.xlu0 %826, %v41
    %v828 = vpop.permute.xlu0 %827
    %v830 = vadd.f32 %v824, %v828
    %831 = vst [vmem:[#allocation2] sm:$0x1] %v830
    // Predicated region
    $region26: #{tpu_custom_call.1} parent=1 // pred_check
      _
    $region27: #{tpu_custom_call.1} parent=1 // pred_check_branch
      %833 = sbr.rel (0) target = $region29
    $region28: #{tpu_custom_call.1} parent=1 // pred_region
      %835 = vsyncadd [#allocation3], 0
      %s837 = sshll.u32 [#allocation2], 4
      %s838 = int_to_ptr.vmem [resolvable:$true] %s837
      %s839 = sshll.u32 %s6, 4
      %s840 = int_to_ptr.hbm [resolvable:$true] %s839
      %842 = dma.vmem_to_hbm [thread:$0]  %s838, 16, %s840, [#allocation3]
    $region29: #{tpu_custom_call.1} parent=1 // pred_fallthru
      _
    // Predicated region
    $region30: #{tpu_custom_call.1} parent=1 // pred_check
      _
    $region31: #{tpu_custom_call.1} parent=1 // pred_check_branch
      %844 = sbr.rel (0) target = $region33
    $region32: #{tpu_custom_call.1} parent=1 // pred_region
      %846 = dma.done [#allocation3], 16
    $region33: #{tpu_custom_call.1} parent=1 // pred_fallthru
      _
    %847 = vsyncpa [#allocation3], 1

// kernel: tpu_custom_call.1
$region0: #{tpu_custom_call.1}
  #allocation0 [shape = 'u32[]', space=smem, size = 0x4, offset = 0x4, fixed_abs, tag = 'smem constant byte address 0x4 - core index']
  #allocation1 [shape = 'u32[72,128]{1,0:T(1,128)}', space=vmem, size = 0x9000, scoped, tag = 'internal scratch']
  %s0 = inlined_call_operand.vmem [shape: bf16[128,32], index: 0, kind: input, shape index: {}]
  %s1 = inlined_call_operand.vmem [shape: bf16[128,32], index: 1, kind: input, shape index: {}]
  %s2 = inlined_call_operand.vmem [shape: bf16[128,128], index: 2, kind: input, shape index: {}]
  %s3 = inlined_call_operand.vmem [shape: bf16[64,128], index: 3, kind: input, shape index: {}]
  %s4 = inlined_call_operand.vmem [shape: bf16[64,64], index: 4, kind: input, shape index: {}]
  %s5 = inlined_call_operand.vmem [shape: f32[128,6], index: 5, kind: input, shape index: {}]
  %s6 = inlined_call_operand.hbm [shape: f32[1,128], index: 6, kind: output, shape index: {}]
  %s7 = sld [smem:[#allocation0]]
  $region34: #{tpu_custom_call.1} parent=0
    _
  %s9 = ssub.s32 1, %s7
  %s10 = scalar_select 0, %s9, %s7
  $region1: #{tpu_custom_call.1} parent=0
    #allocation2 [shape = 'u8[512]{0}', space=vmem, size = 0x400, scoped, tag = 'output window, operand 0, single buffered']
    #allocation3 [shape = 's32[1]{0}', space=sflag, size = 0x4, scoped, tag = 'scoped memory for tpu_custom_call.1']
    %11 = vsyncpa [#allocation3], 0
    // Predicated region
    $region2: #{tpu_custom_call.1} parent=1 // pred_check
      _
    $region3: #{tpu_custom_call.1} parent=1 // pred_check_branch
      %13 = sbr.rel (0) target = $region5
    $region4: #{tpu_custom_call.1} parent=1 // pred_region
      _
    $region5: #{tpu_custom_call.1} parent=1 // pred_fallthru
      _
    // Predicated region
    $region6: #{tpu_custom_call.1} parent=1 // pred_check
      _
    $region7: #{tpu_custom_call.1} parent=1 // pred_check_branch
      %15 = sbr.rel (0) target = $region9
    $region8: #{tpu_custom_call.1} parent=1 // pred_region
      _
    $region9: #{tpu_custom_call.1} parent=1 // pred_fallthru
      _
    // Predicated region
    $region10: #{tpu_custom_call.1} parent=1 // pred_check
      _
    $region11: #{tpu_custom_call.1} parent=1 // pred_check_branch
      %17 = sbr.rel (0) target = $region13
    $region12: #{tpu_custom_call.1} parent=1 // pred_region
      _
    $region13: #{tpu_custom_call.1} parent=1 // pred_fallthru
      _
    // Predicated region
    $region14: #{tpu_custom_call.1} parent=1 // pred_check
      _
    $region15: #{tpu_custom_call.1} parent=1 // pred_check_branch
      %19 = sbr.rel (0) target = $region17
    $region16: #{tpu_custom_call.1} parent=1 // pred_region
      _
    $region17: #{tpu_custom_call.1} parent=1 // pred_fallthru
      _
    // Predicated region
    $region18: #{tpu_custom_call.1} parent=1 // pred_check
      _
    $region19: #{tpu_custom_call.1} parent=1 // pred_check_branch
      %21 = sbr.rel (0) target = $region21
    $region20: #{tpu_custom_call.1} parent=1 // pred_region
      _
    $region21: #{tpu_custom_call.1} parent=1 // pred_fallthru
      _
    // Predicated region
    $region22: #{tpu_custom_call.1} parent=1 // pred_check
      _
    $region23: #{tpu_custom_call.1} parent=1 // pred_check_branch
      %23 = sbr.rel (0) target = $region25
    $region24: #{tpu_custom_call.1} parent=1 // pred_region
      _
    $region25: #{tpu_custom_call.1} parent=1 // pred_fallthru
      _
    %v25 = vld [vmem:[%s5] sm:$0xff]
    %v26 = vld [vmem:[%s5 + $0x8] sm:$0xff]
    %v27 = vld [vmem:[%s5 + $0x10] sm:$0xff]
    %v28 = vld [vmem:[%s5 + $0x18] sm:$0xff]
    %v29 = vld [vmem:[%s5 + $0x20] sm:$0xff]
    %v30 = vld [vmem:[%s5 + $0x28] sm:$0xff]
    %v31 = vld [vmem:[%s5 + $0x30] sm:$0xff]
    %v32 = vld [vmem:[%s5 + $0x38] sm:$0xff]
    %v33 = vld [vmem:[%s5 + $0x40] sm:$0xff]
    %v34 = vld [vmem:[%s5 + $0x48] sm:$0xff]
    %v35 = vld [vmem:[%s5 + $0x50] sm:$0xff]
    %v36 = vld [vmem:[%s5 + $0x58] sm:$0xff]
    %v37 = vld [vmem:[%s5 + $0x60] sm:$0xff]
    %v38 = vld [vmem:[%s5 + $0x68] sm:$0xff]
    %v39 = vld [vmem:[%s5 + $0x70] sm:$0xff]
    %v40 = vld [vmem:[%s5 + $0x78] sm:$0xff]
    %v41 = vld [vmem:[%s5] sm:$0x1]
    %v42 = vld [vmem:[%s0] sm:$0xf]
    %v43 = vld [vmem:[%s0 + $0x4] sm:$0xf]
    %v44 = vld [vmem:[%s0 + $0x8] sm:$0xf]
    %v45 = vld [vmem:[%s0 + $0xc] sm:$0xf]
    %v46 = vld [vmem:[%s0 + $0x10] sm:$0xf]
    %v47 = vld [vmem:[%s0 + $0x14] sm:$0xf]
    %v48 = vld [vmem:[%s0 + $0x18] sm:$0xf]
    %v49 = vld [vmem:[%s0 + $0x1c] sm:$0xf]
    %v50 = vld [vmem:[%s0 + $0x20] sm:$0xf]
    %v51 = vld [vmem:[%s0 + $0x24] sm:$0xf]
    %v52 = vld [vmem:[%s0 + $0x28] sm:$0xf]
    %v53 = vld [vmem:[%s0 + $0x2c] sm:$0xf]
    %v54 = vld [vmem:[%s0 + $0x30] sm:$0xf]
    %v55 = vld [vmem:[%s0 + $0x34] sm:$0xf]
    %v56 = vld [vmem:[%s0 + $0x38] sm:$0xf]
    %v57 = vld [vmem:[%s0 + $0x3c] sm:$0xf]
    %v58 = vld [vmem:[%s1] sm:$0xf]
    %v59 = vld [vmem:[%s1 + $0x4] sm:$0xf]
    %v60 = vld [vmem:[%s1 + $0x8] sm:$0xf]
    %v61 = vld [vmem:[%s1 + $0xc] sm:$0xf]
    %v62 = vld [vmem:[%s1 + $0x10] sm:$0xf]
    %v63 = vld [vmem:[%s1 + $0x14] sm:$0xf]
    %v64 = vld [vmem:[%s1 + $0x18] sm:$0xf]
    %v65 = vld [vmem:[%s1 + $0x1c] sm:$0xf]
    %v66 = vld [vmem:[%s1 + $0x20] sm:$0xf]
    %v67 = vld [vmem:[%s1 + $0x24] sm:$0xf]
    %v68 = vld [vmem:[%s1 + $0x28] sm:$0xf]
    %v69 = vld [vmem:[%s1 + $0x2c] sm:$0xf]
    %v70 = vld [vmem:[%s1 + $0x30] sm:$0xf]
    %v71 = vld [vmem:[%s1 + $0x34] sm:$0xf]
    %v72 = vld [vmem:[%s1 + $0x38] sm:$0xf]
    %v73 = vld [vmem:[%s1 + $0x3c] sm:$0xf]
    %75 = vset.pattern.permute.xlu0 0
    %76 = vperm.xlu0 %75, %v25
    %v77 = vpop.permute.xlu0 %76
    %80 = vset.pattern.permute.xlu0 0
    %81 = vperm.xlu0 %80, %v26
    %v82 = vpop.permute.xlu0 %81
    %85 = vset.pattern.permute.xlu0 0
    %86 = vperm.xlu0 %85, %v27
    %v87 = vpop.permute.xlu0 %86
    %90 = vset.pattern.permute.xlu0 0
    %91 = vperm.xlu0 %90, %v28
    %v92 = vpop.permute.xlu0 %91
    %95 = vset.pattern.permute.xlu0 0
    %96 = vperm.xlu0 %95, %v29
    %v97 = vpop.permute.xlu0 %96
    %100 = vset.pattern.permute.xlu0 0
    %101 = vperm.xlu0 %100, %v30
    %v102 = vpop.permute.xlu0 %101
    %105 = vset.pattern.permute.xlu0 0
    %106 = vperm.xlu0 %105, %v31
    %v107 = vpop.permute.xlu0 %106
    %110 = vset.pattern.permute.xlu0 0
    %111 = vperm.xlu0 %110, %v32
    %v112 = vpop.permute.xlu0 %111
    %115 = vset.pattern.permute.xlu0 0
    %116 = vperm.xlu0 %115, %v33
    %v117 = vpop.permute.xlu0 %116
    %120 = vset.pattern.permute.xlu0 0
    %121 = vperm.xlu0 %120, %v34
    %v122 = vpop.permute.xlu0 %121
    %125 = vset.pattern.permute.xlu0 0
    %126 = vperm.xlu0 %125, %v35
    %v127 = vpop.permute.xlu0 %126
    %130 = vset.pattern.permute.xlu0 0
    %131 = vperm.xlu0 %130, %v36
    %v132 = vpop.permute.xlu0 %131
    %135 = vset.pattern.permute.xlu0 0
    %136 = vperm.xlu0 %135, %v37
    %v137 = vpop.permute.xlu0 %136
    %140 = vset.pattern.permute.xlu0 0
    %141 = vperm.xlu0 %140, %v38
    %v142 = vpop.permute.xlu0 %141
    %145 = vset.pattern.permute.xlu0 0
    %146 = vperm.xlu0 %145, %v39
    %v147 = vpop.permute.xlu0 %146
    %150 = vset.pattern.permute.xlu0 0
    %151 = vperm.xlu0 %150, %v40
    %v152 = vpop.permute.xlu0 %151
    %v170 = vunpack.c.l.b16 %v58
    %v171 = vunpack.c.l.b16 %v59
    %v172 = vunpack.c.l.b16 %v60
    %v173 = vunpack.c.l.b16 %v61
    %v174 = vunpack.c.l.b16 %v62
    %v175 = vunpack.c.l.b16 %v63
    %v176 = vunpack.c.l.b16 %v64
    %v177 = vunpack.c.l.b16 %v65
    %v178 = vunpack.c.l.b16 %v66
    %v179 = vunpack.c.l.b16 %v67
    %v180 = vunpack.c.l.b16 %v68
    %v181 = vunpack.c.l.b16 %v69
    %v182 = vunpack.c.l.b16 %v70
    %v183 = vunpack.c.l.b16 %v71
    %v184 = vunpack.c.l.b16 %v72
    %v185 = vunpack.c.l.b16 %v73
    %v186 = vpack.c.b16 %v171, %v170
    %v187 = vpack.c.b16 %v173, %v172
    %v188 = vpack.c.b16 %v175, %v174
    %v189 = vpack.c.b16 %v177, %v176
    %v190 = vpack.c.b16 %v179, %v178
    %v191 = vpack.c.b16 %v181, %v180
    %v192 = vpack.c.b16 %v183, %v182
    %v193 = vpack.c.b16 %v185, %v184
    %v210 = vunpack.c.l.b16 %v42
    %v211 = vunpack.c.l.b16 %v43
    %v212 = vunpack.c.l.b16 %v44
    %v213 = vunpack.c.l.b16 %v45
    %v214 = vunpack.c.l.b16 %v46
    %v215 = vunpack.c.l.b16 %v47
    %v216 = vunpack.c.l.b16 %v48
    %v217 = vunpack.c.l.b16 %v49
    %v218 = vunpack.c.l.b16 %v50
    %v219 = vunpack.c.l.b16 %v51
    %v220 = vunpack.c.l.b16 %v52
    %v221 = vunpack.c.l.b16 %v53
    %v222 = vunpack.c.l.b16 %v54
    %v223 = vunpack.c.l.b16 %v55
    %v224 = vunpack.c.l.b16 %v56
    %v225 = vunpack.c.l.b16 %v57
    %v226 = vpack.c.b16 %v211, %v210
    %v227 = vpack.c.b16 %v213, %v212
    %v228 = vpack.c.b16 %v215, %v214
    %v229 = vpack.c.b16 %v217, %v216
    %v230 = vpack.c.b16 %v219, %v218
    %v231 = vpack.c.b16 %v221, %v220
    %v232 = vpack.c.b16 %v223, %v222
    %v233 = vpack.c.b16 %v225, %v224
    %vm234 = vcmask 261120
    %v236 = vsel %vm234, %v186, 0
    %v239 = vsel %vm234, %v187, 0
    %v242 = vsel %vm234, %v188, 0
    %v245 = vsel %vm234, %v189, 0
    %v248 = vsel %vm234, %v190, 0
    %v251 = vsel %vm234, %v191, 0
    %v254 = vsel %vm234, %v192, 0
    %v257 = vsel %vm234, %v193, 0
    %v260 = vsel %vm234, %v226, 0
    %v263 = vsel %vm234, %v227, 0
    %v266 = vsel %vm234, %v228, 0
    %v269 = vsel %vm234, %v229, 0
    %v272 = vsel %vm234, %v230, 0
    %v275 = vsel %vm234, %v231, 0
    %v278 = vsel %vm234, %v232, 0
    %v281 = vsel %vm234, %v233, 0
    %283 = vmatpush.bf16.xpose.msra.mxu0 %v281
    %284 = vmatpush.bf16.xpose.msra.mxu0 %v278
    %285 = vmatpush.bf16.xpose.msra.mxu0 %v275
    %286 = vmatpush.bf16.xpose.msra.mxu0 %v272
    %287 = vmatpush.bf16.xpose.msra.mxu0 %v269
    %288 = vmatpush.bf16.xpose.msra.mxu0 %v266
    %289 = vmatpush.bf16.xpose.msra.mxu0 %v263
    %290 = vmatpush.bf16.xpose.msra.mxu0 %v260
    %291 = vmatmul.bf16.gmra.mxu0 %v236
    %v292 = vpop.f32.mrf.mxu0
    %v293 = vadd.f32 %v77, %v292
    %v294 = vpop.f32.mrf.mxu0
    %v295 = vadd.f32 %v82, %v294
    %296 = vmatmul.bf16.gmra.mxu0 %v239
    %v297 = vpop.f32.mrf.mxu0
    %v298 = vadd.f32 %v87, %v297
    %v299 = vpop.f32.mrf.mxu0
    %v300 = vadd.f32 %v92, %v299
    %301 = vmatmul.bf16.gmra.mxu0 %v242
    %v302 = vpop.f32.mrf.mxu0
    %v303 = vadd.f32 %v97, %v302
    %v304 = vpop.f32.mrf.mxu0
    %v305 = vadd.f32 %v102, %v304
    %306 = vmatmul.bf16.gmra.mxu0 %v245
    %v307 = vpop.f32.mrf.mxu0
    %v308 = vadd.f32 %v107, %v307
    %v309 = vpop.f32.mrf.mxu0
    %v310 = vadd.f32 %v112, %v309
    %311 = vmatmul.bf16.gmra.mxu0 %v248
    %v312 = vpop.f32.mrf.mxu0
    %v313 = vadd.f32 %v117, %v312
    %v314 = vpop.f32.mrf.mxu0
    %v315 = vadd.f32 %v122, %v314
    %316 = vmatmul.bf16.gmra.mxu0 %v251
    %v317 = vpop.f32.mrf.mxu0
    %v318 = vadd.f32 %v127, %v317
    %v319 = vpop.f32.mrf.mxu0
    %v320 = vadd.f32 %v132, %v319
    %321 = vmatmul.bf16.gmra.mxu0 %v254
    %v322 = vpop.f32.mrf.mxu0
    %v323 = vadd.f32 %v137, %v322
    %v324 = vpop.f32.mrf.mxu0
    %v325 = vadd.f32 %v142, %v324
    %326 = vmatmul.bf16.gmra.mxu0 %v257
    %v327 = vpop.f32.mrf.mxu0
    %v328 = vadd.f32 %v147, %v327
    %v329 = vpop.f32.mrf.mxu0
    %v330 = vadd.f32 %v152, %v329
    %331 = vdwg.mxu0
    %v332 = vmax.f32 %v293, 0.0
    %v333 = vmax.f32 %v295, 0.0
    %v334 = vmax.f32 %v298, 0.0
    %v335 = vmax.f32 %v300, 0.0
    %v336 = vmax.f32 %v303, 0.0
    %v337 = vmax.f32 %v305, 0.0
    %v338 = vmax.f32 %v308, 0.0
    %v339 = vmax.f32 %v310, 0.0
    %v340 = vmax.f32 %v313, 0.0
    %v341 = vmax.f32 %v315, 0.0
    %v342 = vmax.f32 %v318, 0.0
    %v343 = vmax.f32 %v320, 0.0
    %v344 = vmax.f32 %v323, 0.0
    %v345 = vmax.f32 %v325, 0.0
    %v346 = vmax.f32 %v328, 0.0
    %v347 = vmax.f32 %v330, 0.0
    %v348 = vld [vmem:[%s2] sm:$0xf]
    %v349 = vld [vmem:[%s2 + $0x4] sm:$0xf]
    %v350 = vld [vmem:[%s2 + $0x8] sm:$0xf]
    %v351 = vld [vmem:[%s2 + $0xc] sm:$0xf]
    %v352 = vld [vmem:[%s2 + $0x10] sm:$0xf]
    %v353 = vld [vmem:[%s2 + $0x14] sm:$0xf]
    %v354 = vld [vmem:[%s2 + $0x18] sm:$0xf]
    %v355 = vld [vmem:[%s2 + $0x1c] sm:$0xf]
    %v356 = vld [vmem:[%s2 + $0x20] sm:$0xf]
    %v357 = vld [vmem:[%s2 + $0x24] sm:$0xf]
    %v358 = vld [vmem:[%s2 + $0x28] sm:$0xf]
    %v359 = vld [vmem:[%s2 + $0x2c] sm:$0xf]
    %v360 = vld [vmem:[%s2 + $0x30] sm:$0xf]
    %v361 = vld [vmem:[%s2 + $0x34] sm:$0xf]
    %v362 = vld [vmem:[%s2 + $0x38] sm:$0xf]
    %v363 = vld [vmem:[%s2 + $0x3c] sm:$0xf]
    %v364 = vpack.c.bf16 %v333, %v332
    %v365 = vpack.c.bf16 %v335, %v334
    %v366 = vpack.c.bf16 %v337, %v336
    %v367 = vpack.c.bf16 %v339, %v338
    %v368 = vpack.c.bf16 %v341, %v340
    %v369 = vpack.c.bf16 %v343, %v342
    %v370 = vpack.c.bf16 %v345, %v344
    %v371 = vpack.c.bf16 %v347, %v346
    %372 = vset.pattern.permute.xlu0 1
    %373 = vperm.xlu0 %372, %v25
    %v374 = vpop.permute.xlu0 %373
    %376 = vset.pattern.permute.xlu0 1
    %377 = vperm.xlu0 %376, %v26
    %v378 = vpop.permute.xlu0 %377
    %380 = vset.pattern.permute.xlu0 1
    %381 = vperm.xlu0 %380, %v27
    %v382 = vpop.permute.xlu0 %381
    %384 = vset.pattern.permute.xlu0 1
    %385 = vperm.xlu0 %384, %v28
    %v386 = vpop.permute.xlu0 %385
    %388 = vset.pattern.permute.xlu0 1
    %389 = vperm.xlu0 %388, %v29
    %v390 = vpop.permute.xlu0 %389
    %392 = vset.pattern.permute.xlu0 1
    %393 = vperm.xlu0 %392, %v30
    %v394 = vpop.permute.xlu0 %393
    %396 = vset.pattern.permute.xlu0 1
    %397 = vperm.xlu0 %396, %v31
    %v398 = vpop.permute.xlu0 %397
    %400 = vset.pattern.permute.xlu0 1
    %401 = vperm.xlu0 %400, %v32
    %v402 = vpop.permute.xlu0 %401
    %404 = vset.pattern.permute.xlu0 1
    %405 = vperm.xlu0 %404, %v33
    %v406 = vpop.permute.xlu0 %405
    %408 = vset.pattern.permute.xlu0 1
    %409 = vperm.xlu0 %408, %v34
    %v410 = vpop.permute.xlu0 %409
    %412 = vset.pattern.permute.xlu0 1
    %413 = vperm.xlu0 %412, %v35
    %v414 = vpop.permute.xlu0 %413
    %416 = vset.pattern.permute.xlu0 1
    %417 = vperm.xlu0 %416, %v36
    %v418 = vpop.permute.xlu0 %417
    %420 = vset.pattern.permute.xlu0 1
    %421 = vperm.xlu0 %420, %v37
    %v422 = vpop.permute.xlu0 %421
    %424 = vset.pattern.permute.xlu0 1
    %425 = vperm.xlu0 %424, %v38
    %v426 = vpop.permute.xlu0 %425
    %428 = vset.pattern.permute.xlu0 1
    %429 = vperm.xlu0 %428, %v39
    %v430 = vpop.permute.xlu0 %429
    %432 = vset.pattern.permute.xlu0 1
    %433 = vperm.xlu0 %432, %v40
    %v434 = vpop.permute.xlu0 %433
    %v452 = vunpack.c.l.b16 %v348
    %v453 = vunpack.c.l.b16 %v349
    %v454 = vunpack.c.l.b16 %v350
    %v455 = vunpack.c.l.b16 %v351
    %v456 = vunpack.c.l.b16 %v352
    %v457 = vunpack.c.l.b16 %v353
    %v458 = vunpack.c.l.b16 %v354
    %v459 = vunpack.c.l.b16 %v355
    %v460 = vunpack.c.l.b16 %v356
    %v461 = vunpack.c.l.b16 %v357
    %v462 = vunpack.c.l.b16 %v358
    %v463 = vunpack.c.l.b16 %v359
    %v464 = vunpack.c.l.b16 %v360
    %v465 = vunpack.c.l.b16 %v361
    %v466 = vunpack.c.l.b16 %v362
    %v467 = vunpack.c.l.b16 %v363
    %v468 = vpack.c.b16 %v453, %v452
    %v469 = vpack.c.b16 %v455, %v454
    %v470 = vpack.c.b16 %v457, %v456
    %v471 = vpack.c.b16 %v459, %v458
    %v472 = vpack.c.b16 %v461, %v460
    %v473 = vpack.c.b16 %v463, %v462
    %v474 = vpack.c.b16 %v465, %v464
    %v475 = vpack.c.b16 %v467, %v466
    %484 = vmatpush.bf16.msra.mxu0 %v371
    %485 = vmatpush.bf16.msra.mxu0 %v370
    %486 = vmatpush.bf16.msra.mxu0 %v369
    %487 = vmatpush.bf16.msra.mxu0 %v368
    %488 = vmatpush.bf16.msra.mxu0 %v367
    %489 = vmatpush.bf16.msra.mxu0 %v366
    %490 = vmatpush.bf16.msra.mxu0 %v365
    %491 = vmatpush.bf16.msra.mxu0 %v364
    %492 = vmatmul.bf16.gmra.mxu0 %v468
    %v493 = vpop.f32.mrf.mxu0
    %v494 = vadd.f32 %v374, %v493
    %v495 = vpop.f32.mrf.mxu0
    %v496 = vadd.f32 %v378, %v495
    %497 = vmatmul.bf16.gmra.mxu0 %v469
    %v498 = vpop.f32.mrf.mxu0
    %v499 = vadd.f32 %v382, %v498
    %v500 = vpop.f32.mrf.mxu0
    %v501 = vadd.f32 %v386, %v500
    %502 = vmatmul.bf16.gmra.mxu0 %v470
    %v503 = vpop.f32.mrf.mxu0
    %v504 = vadd.f32 %v390, %v503
    %v505 = vpop.f32.mrf.mxu0
    %v506 = vadd.f32 %v394, %v505
    %507 = vmatmul.bf16.gmra.mxu0 %v471
    %v508 = vpop.f32.mrf.mxu0
    %v509 = vadd.f32 %v398, %v508
    %v510 = vpop.f32.mrf.mxu0
    %v511 = vadd.f32 %v402, %v510
    %512 = vmatmul.bf16.gmra.mxu0 %v472
    %v513 = vpop.f32.mrf.mxu0
    %v514 = vadd.f32 %v406, %v513
    %v515 = vpop.f32.mrf.mxu0
    %v516 = vadd.f32 %v410, %v515
    %517 = vmatmul.bf16.gmra.mxu0 %v473
    %v518 = vpop.f32.mrf.mxu0
    %v519 = vadd.f32 %v414, %v518
    %v520 = vpop.f32.mrf.mxu0
    %v521 = vadd.f32 %v418, %v520
    %522 = vmatmul.bf16.gmra.mxu0 %v474
    %v523 = vpop.f32.mrf.mxu0
    %v524 = vadd.f32 %v422, %v523
    %v525 = vpop.f32.mrf.mxu0
    %v526 = vadd.f32 %v426, %v525
    %527 = vmatmul.bf16.gmra.mxu0 %v475
    %v528 = vpop.f32.mrf.mxu0
    %v529 = vadd.f32 %v430, %v528
    %v530 = vpop.f32.mrf.mxu0
    %v531 = vadd.f32 %v434, %v530
    %532 = vdwg.mxu0
    %v533 = vmax.f32 %v494, 0.0
    %v534 = vmax.f32 %v496, 0.0
    %v535 = vmax.f32 %v499, 0.0
    %v536 = vmax.f32 %v501, 0.0
    %v537 = vmax.f32 %v504, 0.0
    %v538 = vmax.f32 %v506, 0.0
    %v539 = vmax.f32 %v509, 0.0
    %v540 = vmax.f32 %v511, 0.0
    %v541 = vmax.f32 %v514, 0.0
    %v542 = vmax.f32 %v516, 0.0
    %v543 = vmax.f32 %v519, 0.0
    %v544 = vmax.f32 %v521, 0.0
    %v545 = vmax.f32 %v524, 0.0
    %v546 = vmax.f32 %v526, 0.0
    %v547 = vmax.f32 %v529, 0.0
    %v548 = vmax.f32 %v531, 0.0
    %v549 = vld [vmem:[%s3] sm:$0xf]
    %v550 = vld [vmem:[%s3 + $0x4] sm:$0xf]
    %v551 = vld [vmem:[%s3 + $0x8] sm:$0xf]
    %v552 = vld [vmem:[%s3 + $0xc] sm:$0xf]
    %v553 = vld [vmem:[%s3 + $0x10] sm:$0xf]
    %v554 = vld [vmem:[%s3 + $0x14] sm:$0xf]
    %v555 = vld [vmem:[%s3 + $0x18] sm:$0xf]
    %v556 = vld [vmem:[%s3 + $0x1c] sm:$0xf]
    %v557 = vpack.c.bf16 %v534, %v533
    %v558 = vpack.c.bf16 %v536, %v535
    %v559 = vpack.c.bf16 %v538, %v537
    %v560 = vpack.c.bf16 %v540, %v539
    %v561 = vpack.c.bf16 %v542, %v541
    %v562 = vpack.c.bf16 %v544, %v543
    %v563 = vpack.c.bf16 %v546, %v545
    %v564 = vpack.c.bf16 %v548, %v547
    %565 = vset.pattern.permute.xlu0 2
    %566 = vperm.xlu0 %565, %v25
    %v567 = vpop.permute.xlu0 %566
    %569 = vset.pattern.permute.xlu0 2
    %570 = vperm.xlu0 %569, %v26
    %v571 = vpop.permute.xlu0 %570
    %573 = vset.pattern.permute.xlu0 2
    %574 = vperm.xlu0 %573, %v27
    %v575 = vpop.permute.xlu0 %574
    %577 = vset.pattern.permute.xlu0 2
    %578 = vperm.xlu0 %577, %v28
    %v579 = vpop.permute.xlu0 %578
    %581 = vset.pattern.permute.xlu0 2
    %582 = vperm.xlu0 %581, %v29
    %v583 = vpop.permute.xlu0 %582
    %585 = vset.pattern.permute.xlu0 2
    %586 = vperm.xlu0 %585, %v30
    %v587 = vpop.permute.xlu0 %586
    %589 = vset.pattern.permute.xlu0 2
    %590 = vperm.xlu0 %589, %v31
    %v591 = vpop.permute.xlu0 %590
    %593 = vset.pattern.permute.xlu0 2
    %594 = vperm.xlu0 %593, %v32
    %v595 = vpop.permute.xlu0 %594
    %v605 = vunpack.c.l.b16 %v549
    %v606 = vunpack.c.l.b16 %v550
    %v607 = vunpack.c.l.b16 %v551
    %v608 = vunpack.c.l.b16 %v552
    %v609 = vunpack.c.l.b16 %v553
    %v610 = vunpack.c.l.b16 %v554
    %v611 = vunpack.c.l.b16 %v555
    %v612 = vunpack.c.l.b16 %v556
    %v613 = vpack.c.b16 %v606, %v605
    %v614 = vpack.c.b16 %v608, %v607
    %v615 = vpack.c.b16 %v610, %v609
    %v616 = vpack.c.b16 %v612, %v611
    %621 = vmatpush.bf16.msra.mxu0 %v564
    %622 = vmatpush.bf16.msra.mxu0 %v563
    %623 = vmatpush.bf16.msra.mxu0 %v562
    %624 = vmatpush.bf16.msra.mxu0 %v561
    %625 = vmatpush.bf16.msra.mxu0 %v560
    %626 = vmatpush.bf16.msra.mxu0 %v559
    %627 = vmatpush.bf16.msra.mxu0 %v558
    %628 = vmatpush.bf16.msra.mxu0 %v557
    %629 = vmatmul.bf16.gmra.mxu0 %v613
    %v630 = vpop.f32.mrf.mxu0
    %v631 = vadd.f32 %v567, %v630
    %v632 = vpop.f32.mrf.mxu0
    %v633 = vadd.f32 %v571, %v632
    %634 = vmatmul.bf16.gmra.mxu0 %v614
    %v635 = vpop.f32.mrf.mxu0
    %v636 = vadd.f32 %v575, %v635
    %v637 = vpop.f32.mrf.mxu0
    %v638 = vadd.f32 %v579, %v637
    %639 = vmatmul.bf16.gmra.mxu0 %v615
    %v640 = vpop.f32.mrf.mxu0
    %v641 = vadd.f32 %v583, %v640
    %v642 = vpop.f32.mrf.mxu0
    %v643 = vadd.f32 %v587, %v642
    %644 = vmatmul.bf16.gmra.mxu0 %v616
    %v645 = vpop.f32.mrf.mxu0
    %v646 = vadd.f32 %v591, %v645
    %v647 = vpop.f32.mrf.mxu0
    %v648 = vadd.f32 %v595, %v647
    %649 = vdwg.mxu0
    %v650 = vmax.f32 %v631, 0.0
    %v651 = vmax.f32 %v633, 0.0
    %v652 = vmax.f32 %v636, 0.0
    %v653 = vmax.f32 %v638, 0.0
    %v654 = vmax.f32 %v641, 0.0
    %v655 = vmax.f32 %v643, 0.0
    %v656 = vmax.f32 %v646, 0.0
    %v657 = vmax.f32 %v648, 0.0
    %v658 = vld [vmem:[%s4] sm:$0xf]
    %v659 = vld [vmem:[%s4 + $0x4] sm:$0xf]
    %v660 = vld [vmem:[%s4 + $0x8] sm:$0xf]
    %v661 = vld [vmem:[%s4 + $0xc] sm:$0xf]
    %v662 = vld [vmem:[%s4 + $0x10] sm:$0xf]
    %v663 = vld [vmem:[%s4 + $0x14] sm:$0xf]
    %v664 = vld [vmem:[%s4 + $0x18] sm:$0xf]
    %v665 = vld [vmem:[%s4 + $0x1c] sm:$0xf]
    %v666 = vpack.c.bf16 %v651, %v650
    %v667 = vpack.c.bf16 %v653, %v652
    %v668 = vpack.c.bf16 %v655, %v654
    %v669 = vpack.c.bf16 %v657, %v656
    %670 = vset.pattern.permute.xlu0 3
    %671 = vperm.xlu0 %670, %v25
    %v672 = vpop.permute.xlu0 %671
    %674 = vset.pattern.permute.xlu0 3
    %675 = vperm.xlu0 %674, %v26
    %v676 = vpop.permute.xlu0 %675
    %678 = vset.pattern.permute.xlu0 3
    %679 = vperm.xlu0 %678, %v27
    %v680 = vpop.permute.xlu0 %679
    %682 = vset.pattern.permute.xlu0 3
    %683 = vperm.xlu0 %682, %v28
    %v684 = vpop.permute.xlu0 %683
    %686 = vset.pattern.permute.xlu0 3
    %687 = vperm.xlu0 %686, %v29
    %v688 = vpop.permute.xlu0 %687
    %690 = vset.pattern.permute.xlu0 3
    %691 = vperm.xlu0 %690, %v30
    %v692 = vpop.permute.xlu0 %691
    %694 = vset.pattern.permute.xlu0 3
    %695 = vperm.xlu0 %694, %v31
    %v696 = vpop.permute.xlu0 %695
    %698 = vset.pattern.permute.xlu0 3
    %699 = vperm.xlu0 %698, %v32
    %v700 = vpop.permute.xlu0 %699
    %v710 = vunpack.c.l.b16 %v658
    %v711 = vunpack.c.l.b16 %v659
    %v712 = vunpack.c.l.b16 %v660
    %v713 = vunpack.c.l.b16 %v661
    %v714 = vunpack.c.l.b16 %v662
    %v715 = vunpack.c.l.b16 %v663
    %v716 = vunpack.c.l.b16 %v664
    %v717 = vunpack.c.l.b16 %v665
    %v718 = vpack.c.b16 %v711, %v710
    %v719 = vpack.c.b16 %v713, %v712
    %v720 = vpack.c.b16 %v715, %v714
    %v721 = vpack.c.b16 %v717, %v716
    %vm722 = vcmask 523264
    %v724 = vsel %vm722, %v718, 0
    %v727 = vsel %vm722, %v719, 0
    %v730 = vsel %vm722, %v720, 0
    %v733 = vsel %vm722, %v721, 0
    %735 = vmatpush.bf16.msra.mxu0 0
    %736 = vmatpush.bf16.msra.mxu0 0
    %737 = vmatpush.bf16.msra.mxu0 0
    %738 = vmatpush.bf16.msra.mxu0 0
    %739 = vmatpush.bf16.msra.mxu0 %v669
    %740 = vmatpush.bf16.msra.mxu0 %v668
    %741 = vmatpush.bf16.msra.mxu0 %v667
    %742 = vmatpush.bf16.msra.mxu0 %v666
    %743 = vmatmul.bf16.gmra.mxu0 %v724
    %v744 = vpop.f32.mrf.mxu0
    %v745 = vadd.f32 %v672, %v744
    %v746 = vpop.f32.mrf.mxu0
    %v747 = vadd.f32 %v676, %v746
    %748 = vmatmul.bf16.gmra.mxu0 %v727
    %v749 = vpop.f32.mrf.mxu0
    %v750 = vadd.f32 %v680, %v749
    %v751 = vpop.f32.mrf.mxu0
    %v752 = vadd.f32 %v684, %v751
    %753 = vmatmul.bf16.gmra.mxu0 %v730
    %v754 = vpop.f32.mrf.mxu0
    %v755 = vadd.f32 %v688, %v754
    %v756 = vpop.f32.mrf.mxu0
    %v757 = vadd.f32 %v692, %v756
    %758 = vmatmul.bf16.gmra.mxu0 %v733
    %v759 = vpop.f32.mrf.mxu0
    %v760 = vadd.f32 %v696, %v759
    %v761 = vpop.f32.mrf.mxu0
    %v762 = vadd.f32 %v700, %v761
    %763 = vdwg.mxu0
    %v764 = vmax.f32 %v745, 0.0
    %v765 = vmax.f32 %v747, 0.0
    %v766 = vmax.f32 %v750, 0.0
    %v767 = vmax.f32 %v752, 0.0
    %v768 = vmax.f32 %v755, 0.0
    %v769 = vmax.f32 %v757, 0.0
    %v770 = vmax.f32 %v760, 0.0
    %v771 = vmax.f32 %v762, 0.0
    %772 = vset.pattern.permute.xlu0 4
    %773 = vperm.xlu0 %772, %v25
    %v774 = vpop.permute.xlu0 %773
    %776 = vset.pattern.permute.xlu0 4
    %777 = vperm.xlu0 %776, %v26
    %v778 = vpop.permute.xlu0 %777
    %780 = vset.pattern.permute.xlu0 4
    %781 = vperm.xlu0 %780, %v27
    %v782 = vpop.permute.xlu0 %781
    %784 = vset.pattern.permute.xlu0 4
    %785 = vperm.xlu0 %784, %v28
    %v786 = vpop.permute.xlu0 %785
    %788 = vset.pattern.permute.xlu0 4
    %789 = vperm.xlu0 %788, %v29
    %v790 = vpop.permute.xlu0 %789
    %792 = vset.pattern.permute.xlu0 4
    %793 = vperm.xlu0 %792, %v30
    %v794 = vpop.permute.xlu0 %793
    %796 = vset.pattern.permute.xlu0 4
    %797 = vperm.xlu0 %796, %v31
    %v798 = vpop.permute.xlu0 %797
    %800 = vset.pattern.permute.xlu0 4
    %801 = vperm.xlu0 %800, %v32
    %v802 = vpop.permute.xlu0 %801
    %v804 = vmul.f32 %v764, %v774
    %v805 = vmul.f32 %v765, %v778
    %v806 = vmul.f32 %v766, %v782
    %v807 = vmul.f32 %v767, %v786
    %v808 = vmul.f32 %v768, %v790
    %v809 = vmul.f32 %v769, %v794
    %v810 = vmul.f32 %v770, %v798
    %v811 = vmul.f32 %v771, %v802
    %v812 = vadd.f32 %v804, %v805
    %v813 = vadd.f32 %v812, %v806
    %v814 = vadd.f32 %v813, %v807
    %v815 = vadd.f32 %v814, %v808
    %v816 = vadd.f32 %v815, %v809
    %v817 = vadd.f32 %v816, %v810
    %v818 = vadd.f32 %v817, %v811
    %v819 = vrot.slane %v818, 4
    %v820 = vadd.f32 %v818, %v819
    %v821 = vrot.slane %v820, 2
    %v822 = vadd.f32 %v820, %v821
    %v823 = vrot.slane %v822, 1
    %v824 = vadd.f32 %v822, %v823
    %826 = vset.pattern.permute.xlu0 5
    %827 = vperm.xlu0 %826, %v41
    %v828 = vpop.permute.xlu0 %827
    %v830 = vadd.f32 %v824, %v828
    %831 = vst [vmem:[#allocation2] sm:$0x1] %v830
    // Predicated region
    $region26: #{tpu_custom_call.1} parent=1 // pred_check
      _
    $region27: #{tpu_custom_call.1} parent=1 // pred_check_branch
      %833 = sbr.rel (0) target = $region29
    $region28: #{tpu_custom_call.1} parent=1 // pred_region
      %835 = vsyncadd [#allocation3], 0
      %s837 = sshll.u32 [#allocation2], 4
      %s838 = int_to_ptr.vmem [resolvable:$true] %s837
      %s839 = sshll.u32 %s6, 4
      %s840 = int_to_ptr.hbm [resolvable:$true] %s839
      %842 = dma.vmem_to_hbm [thread:$0]  %s838, 16, %s840, [#allocation3]
    $region29: #{tpu_custom_call.1} parent=1 // pred_fallthru
      _
    // Predicated region
    $region30: #{tpu_custom_call.1} parent=1 // pred_check
      _
    $region31: #{tpu_custom_call.1} parent=1 // pred_check_branch
      %844 = sbr.rel (0) target = $region33
    $region32: #{tpu_custom_call.1} parent=1 // pred_region
      %846 = dma.done [#allocation3], 16
    $region33: #{tpu_custom_call.1} parent=1 // pred_fallthru
      _
    %847 = vsyncpa [#allocation3], 1

</llo_original>
